<compile_context>
chip_gen: v7x
topology: tpu7x:2x2x1
jax: 0.10.0
libtpu: 0.0.40
codegen_flags: <defaults>
</compile_context>

<pallas_src>
import jax
import jax.numpy as jnp
import numpy as np
from jax.experimental import pallas as pl
from jax.experimental.pallas import tpu as pltpu

_BN_EPS = 1e-5
_TM_CAP = 1024                    # max rows per tile
_VMEM_LIMIT = 32 * 1024 * 1024    # explicit scoped-VMEM limit, safe on v5e/v6e/v7x
_VMEM_BUDGET = 24 * 1024 * 1024   # target working-set (leave pipeline headroom)


def _conv_stats_kernel(lhs_ref, w_ref, stats_ref):
    """Pass 1: fused 4-phase transposed conv on one M-tile -> partial BN stats.

    lhs_ref  : (TM, 4*Cin)     bf16  4 shifted neighbour views, channel-concat
    w_ref    : (4*Cin, 4*Cout) bf16  fused phase weights
    stats_ref: (1, 2, 4*Cout)  f32   row 0 = column sum, row 1 = column sum sq
    """
    acc = jnp.dot(lhs_ref[...], w_ref[...], preferred_element_type=jnp.float32)
    col_sum = jnp.sum(acc, axis=0, keepdims=True)        # (1, 4*Cout)
    col_sq = jnp.sum(acc * acc, axis=0, keepdims=True)   # (1, 4*Cout)
    stats_ref[...] = jnp.concatenate([col_sum, col_sq], axis=0).reshape(
        stats_ref.shape)


def _conv_bn_relu_kernel(lhs_ref, w_ref, scale_ref, shift_ref, out_ref):
    """Pass 2: recompute the conv matmul, fuse folded BN affine + ReLU.

    scale_ref/shift_ref: (1, 4*Cout) f32 per-column folded BN parameters.
    out_ref            : (TM, 4*Cout) f32 final (pre-interleave) output.
    """
    acc = jnp.dot(lhs_ref[...], w_ref[...], preferred_element_type=jnp.float32)
    out_ref[...] = jnp.maximum(acc * scale_ref[...] + shift_ref[...], 0.0)


def _pick_tile(m, k, cols, cap=_TM_CAP, budget=_VMEM_BUDGET):
    """Largest legal M-tile whose double-buffered working set fits the budget."""
    def working_set(tm):
        return (2 * tm * k * 2          # lhs tile, bf16, double-buffered
                + 2 * k * cols * 2      # fused weight, bf16, double-buffered
                + 2 * tm * cols * 4)    # output tile, f32, double-buffered
    cap = min(cap, m)
    while cap > 8 and working_set(cap) > budget:
        cap -= 8
    if m <= cap:
        return m
    for t in range(cap - cap % 8, 0, -8):
        if m % t == 0:
            return t
    return m   # fallback: single full block (always a legal block shape)


def _build_fused_weight(w_t):
    """(Cin, Cout, 3, 3) ConvTranspose2d weight -> (4*Cin, 4*Cout) fused matrix.

    Row block s = 2*sh + sw selects the (h+sh, w+sw) input view; column block
    p = 2*ph + pw selects the output parity phase (ho = 2h+ph, wo = 2w+pw).
    Derivation: ho = 2h - 1 + kh, wo = 2w - 1 + kw  (stride 2, padding 1).
    """
    cin, cout = w_t.shape[0], w_t.shape[1]
    w4 = jnp.zeros((4, cin, 4, cout), w_t.dtype)
    for ph in range(2):
        for pw in range(2):
            p = 2 * ph + pw
            for sh in range(2):
                for sw in range(2):
                    if (ph == 0 and sh == 1) or (pw == 0 and sw == 1):
                        continue          # this shift does not feed this phase
                    kh = 1 if ph == 0 else (0 if sh == 1 else 2)
                    kw = 1 if pw == 0 else (0 if sw == 1 else 2)
                    w4 = w4.at[2 * sh + sw, :, p, :].set(w_t[:, :, kh, kw])
    return w4.reshape(4 * cin, 4 * cout)


@jax.jit
def up_forward(x_nchw, w_t, gamma, beta):
    """Up.forward.  x_nchw: (N, Cin, H, W); w_t: (Cin, Cout, 3, 3) ConvTranspose2d
    weight; gamma/beta: (Cout,).  Returns (N, Cout, 2H, 2W)."""
    N, Cin, H, W = x_nchw.shape
    Cout = w_t.shape[1]
    Ho, Wo = 2 * H, 2 * W
    Mh = N * H * W
    K = 4 * Cin
    COLS = 4 * Cout

    # --- glue: fused lhs/rhs (4 dense shifted views, no zero-insertion) ----
    x = jnp.transpose(x_nchw, (0, 2, 3, 1))                   # NHWC
    x_pad = jnp.pad(x, ((0, 0), (0, 1), (0, 1), (0, 0)))      # one zero row/col, bottom/right
    views = [x_pad[:, sh:sh + H, sw:sw + W, :]
             for sh in range(2) for sw in range(2)]
    lhs = jnp.concatenate(views, axis=-1).reshape(Mh, K).astype(jnp.bfloat16)
    w_fused = _build_fused_weight(w_t).astype(jnp.bfloat16)

    TM = _pick_tile(Mh, K, COLS)
    num_tiles = Mh // TM

    # --- pass 1: bf16 MXU matmul -> per-tile BN partial stats only ---------
    stats = pl.pallas_call(
        _conv_stats_kernel,
        out_shape=jax.ShapeDtypeStruct((num_tiles, 2, COLS), jnp.float32),
        grid_spec=pltpu.PrefetchScalarGridSpec(
            num_scalar_prefetch=0,
            grid=(num_tiles,),
            in_specs=[pl.BlockSpec((TM, K), lambda i: (i, 0)),
                      pl.BlockSpec((K, COLS), lambda i: (0, 0))],
            out_specs=pl.BlockSpec((1, 2, COLS), lambda i: (i, 0, 0))),
        compiler_params=pltpu.CompilerParams(
            dimension_semantics=("parallel",),
            vmem_limit_bytes=_VMEM_LIMIT),
    )(lhs, w_fused)

    # --- BatchNorm2d training-mode stats: tiny per-channel glue ------------
    tot = jnp.sum(stats, axis=0)                       # (2, COLS)
    count = float(N * Ho * Wo)                         # per-channel element count
    sum_c = tot[0].reshape(4, Cout).sum(axis=0)
    sq_c = tot[1].reshape(4, Cout).sum(axis=0)
    mean = sum_c / count
    var = jnp.maximum(sq_c / count - mean * mean, 0.0)  # biased variance
    scale_c = gamma * jax.lax.rsqrt(var + _BN_EPS)
    shift_c = beta - mean * scale_c
    scale_col = jnp.tile(scale_c, 4).reshape(1, COLS)
    shift_col = jnp.tile(shift_c, 4).reshape(1, COLS)

    # --- pass 2: recomputed conv matmul fused with BN affine + ReLU --------
    out_flat = pl.pallas_call(
        _conv_bn_relu_kernel,
        out_shape=jax.ShapeDtypeStruct((Mh, COLS), jnp.float32),
        grid_spec=pltpu.PrefetchScalarGridSpec(
            num_scalar_prefetch=0,
            grid=(num_tiles,),
            in_specs=[pl.BlockSpec((TM, K), lambda i: (i, 0)),
                      pl.BlockSpec((K, COLS), lambda i: (0, 0)),
                      pl.BlockSpec((1, COLS), lambda i: (0, 0)),
                      pl.BlockSpec((1, COLS), lambda i: (0, 0))],
            out_specs=pl.BlockSpec((TM, COLS), lambda i: (i, 0))),
        compiler_params=pltpu.CompilerParams(
            dimension_semantics=("parallel",),
            vmem_limit_bytes=_VMEM_LIMIT),
    )(lhs, w_fused, scale_col, shift_col)

    # --- glue: single transpose -> (N, Cout, 2H, 2W) ------------------------
    out6 = out_flat.reshape(N, H, W, 2, 2, Cout)        # (n, h, w, ph, pw, c)
    out = jnp.transpose(out6, (0, 5, 1, 3, 2, 4))       # (n, c, h, ph, w, pw)
    return out.reshape(N, Cout, Ho, Wo).astype(x_nchw.dtype)


def up_reference(x_nchw, w_t, gamma, beta):
    """Pure-JAX f32 reference (XLA transposed conv + BN + ReLU) for validation."""
    Cout = w_t.shape[1]
    x = jnp.transpose(x_nchw, (0, 2, 3, 1))
    w_conv = jnp.transpose(w_t[:, :, ::-1, ::-1], (2, 3, 0, 1))
    y = jax.lax.conv_general_dilated(
        x, w_conv, window_strides=(1, 1),
        padding=((1, 2), (1, 2)), lhs_dilation=(2, 2),
        dimension_numbers=('NHWC', 'HWIO', 'NHWC'))
    mean = jnp.mean(y, axis=(0, 1, 2), keepdims=True)
    var = jnp.mean((y - mean) ** 2, axis=(0, 1, 2), keepdims=True)
    yh = (y - mean) * jax.lax.rsqrt(var + _BN_EPS)
    yh = yh * gamma.reshape(1, 1, 1, Cout) + beta.reshape(1, 1, 1, Cout)
    yh = jnp.maximum(yh, 0.0)
    return jnp.transpose(yh, (0, 3, 1, 2))


if __name__ == "__main__":
    key = jax.random.PRNGKey(0)
    k1, k2, k3, k4 = jax.random.split(key, 4)

    # (N, Cin, Cout, H, W): a lane-dense single-tile case and a small
    # multi-tile case (exercises the cross-tile stat reduction).
    for (N, Cin, Cout, H, W) in [(2, 64, 32, 16, 16), (2, 8, 4, 32, 32)]:
        x = jax.random.normal(k1, (N, Cin, H, W), jnp.float32)
        # ConvTranspose2d weight layout: (in_ch, out_ch, kH, kW); use_bias=False.
        w_t = 0.1 * jax.random.normal(k2, (Cin, Cout, 3, 3), jnp.float32)
        gamma = 1.0 + 0.1 * jax.random.normal(k3, (Cout,), jnp.float32)
        beta = 0.1 * jax.random.normal(k4, (Cout,), jnp.float32)

        out = jax.block_until_ready(up_forward(x, w_t, gamma, beta))
        ref = jax.block_until_ready(up_reference(x, w_t, gamma, beta))

        assert out.shape == (N, Cout, 2 * H, 2 * W), out.shape
        np.testing.assert_allclose(np.asarray(out), np.asarray(ref),
                                   rtol=2e-2, atol=2e-2)
    print("KERNEL_OK")
</pallas_src>

<mosaic_0001>
module attributes {stable_mosaic.version = 11 : i64} {
  func.func @_conv_stats_kernel(%arg0: i32, %arg1: memref<512x256xbf16, #tpu.memory_space<vmem>>, %arg2: memref<256x128xbf16, #tpu.memory_space<vmem>>, %arg3: memref<1x2x128xf32, #tpu.memory_space<vmem>>) attributes {dimension_semantics = [#tpu.dimension_semantics<parallel>], iteration_bounds = array<i64: 1>, scalar_prefetch = 0 : i64, scratch_operands = 0 : i64, tpu.core_type = #tpu.core_type<tc>, window_params = [{transform_indices = @transform_0, window_bounds = array<i64: 512, 256>}, {pipeline_mode = #tpu.pipeline_mode<synchronous>, transform_indices = @transform_1, window_bounds = array<i64: 256, 128>}, {transform_indices = @transform_2, window_bounds = array<i64: 1, 2, 128>}]} {
    %c0 = arith.constant 0 : index
    %c0_0 = arith.constant 0 : index
    %0 = vector.load %arg1[%c0, %c0_0] : memref<512x256xbf16, #tpu.memory_space<vmem>>, vector<512x256xbf16>
    %c0_1 = arith.constant 0 : index
    %c0_2 = arith.constant 0 : index
    %1 = vector.load %arg2[%c0_1, %c0_2] : memref<256x128xbf16, #tpu.memory_space<vmem>>, vector<256x128xbf16>
    %cst = arith.constant dense<0.000000e+00> : vector<512x128xf32>
    %2 = tpu.matmul %0, %1, %cst {dimension_numbers = #tpu.dot_dimension_numbers<[1], [0], [0], [1], [0, 0, 1, 1], [], []>} : vector<512x256xbf16>, vector<256x128xbf16>, vector<512x128xf32> -> vector<512x128xf32>
    %cst_3 = arith.constant dense<0.000000e+00> : vector<128xf32>
    %3 = vector.multi_reduction <add>, %2, %cst_3 [0] : vector<512x128xf32> to vector<128xf32>
    %4 = vector.shape_cast %3 : vector<128xf32> to vector<1x128xf32>
    %5 = arith.mulf %2, %2 : vector<512x128xf32>
    %cst_4 = arith.constant dense<0.000000e+00> : vector<128xf32>
    %6 = vector.multi_reduction <add>, %5, %cst_4 [0] : vector<512x128xf32> to vector<128xf32>
    %7 = vector.shape_cast %6 : vector<128xf32> to vector<1x128xf32>
    %8 = tpu.concatenate %4, %7 in 0 : vector<1x128xf32>, vector<1x128xf32> -> vector<2x128xf32>
    %9 = vector.shape_cast %8 : vector<2x128xf32> to vector<1x2x128xf32>
    %c0_5 = arith.constant 0 : index
    %c0_6 = arith.constant 0 : index
    %c0_7 = arith.constant 0 : index
    %10 = vector.load %arg3[%c0_5, %c0_6, %c0_7] : memref<1x2x128xf32, #tpu.memory_space<vmem>>, vector<1x2x128xf32>
    tpu.vector_store %arg3[%c0_5, %c0_6, %c0_7], %9 {strides = array<i32>} : memref<1x2x128xf32, #tpu.memory_space<vmem>>, vector<1x2x128xf32>,
    return
  }
  func.func @transform_0(%arg0: i32) -> (i32, i32) {
    %c0_i32 = arith.constant 0 : i32
    %c0_i32_0 = arith.constant 0 : i32
    return %arg0, %c0_i32 : i32, i32
  }
  func.func @transform_1(%arg0: i32) -> (i32, i32) {
    %c0_i32 = arith.constant 0 : i32
    %c0_i32_0 = arith.constant 0 : i32
    %c0_i32_1 = arith.constant 0 : i32
    return %c0_i32, %c0_i32_0 : i32, i32
  }
  func.func @transform_2(%arg0: i32) -> (i32, i32, i32) {
    %c0_i32 = arith.constant 0 : i32
    %c0_i32_0 = arith.constant 0 : i32
    %c0_i32_1 = arith.constant 0 : i32
    return %arg0, %c0_i32, %c0_i32_0 : i32, i32, i32
  }
}

module attributes {stable_mosaic.version = 11 : i64} {
  func.func @_conv_bn_relu_kernel(%arg0: i32, %arg1: memref<512x256xbf16, #tpu.memory_space<vmem>>, %arg2: memref<256x128xbf16, #tpu.memory_space<vmem>>, %arg3: memref<1x128xf32, #tpu.memory_space<vmem>>, %arg4: memref<1x128xf32, #tpu.memory_space<vmem>>, %arg5: memref<512x128xf32, #tpu.memory_space<vmem>>) attributes {dimension_semantics = [#tpu.dimension_semantics<parallel>], iteration_bounds = array<i64: 1>, scalar_prefetch = 0 : i64, scratch_operands = 0 : i64, tpu.core_type = #tpu.core_type<tc>, window_params = [{transform_indices = @transform_0, window_bounds = array<i64: 512, 256>}, {pipeline_mode = #tpu.pipeline_mode<synchronous>, transform_indices = @transform_1, window_bounds = array<i64: 256, 128>}, {pipeline_mode = #tpu.pipeline_mode<synchronous>, transform_indices = @transform_2, window_bounds = array<i64: 1, 128>}, {pipeline_mode = #tpu.pipeline_mode<synchronous>, transform_indices = @transform_3, window_bounds = array<i64: 1, 128>}, {transform_indices = @transform_4, window_bounds = array<i64: 512, 128>}]} {
    %c0 = arith.constant 0 : index
    %c0_0 = arith.constant 0 : index
    %0 = vector.load %arg1[%c0, %c0_0] : memref<512x256xbf16, #tpu.memory_space<vmem>>, vector<512x256xbf16>
    %c0_1 = arith.constant 0 : index
    %c0_2 = arith.constant 0 : index
    %1 = vector.load %arg2[%c0_1, %c0_2] : memref<256x128xbf16, #tpu.memory_space<vmem>>, vector<256x128xbf16>
    %cst = arith.constant dense<0.000000e+00> : vector<512x128xf32>
    %2 = tpu.matmul %0, %1, %cst {dimension_numbers = #tpu.dot_dimension_numbers<[1], [0], [0], [1], [0, 0, 1, 1], [], []>} : vector<512x256xbf16>, vector<256x128xbf16>, vector<512x128xf32> -> vector<512x128xf32>
    %c0_3 = arith.constant 0 : index
    %c0_4 = arith.constant 0 : index
    %3 = vector.load %arg3[%c0_3, %c0_4] : memref<1x128xf32, #tpu.memory_space<vmem>>, vector<1x128xf32>
    %4 = vector.broadcast %3 : vector<1x128xf32> to vector<512x128xf32>
    %5 = arith.mulf %2, %4 : vector<512x128xf32>
    %c0_5 = arith.constant 0 : index
    %c0_6 = arith.constant 0 : index
    %6 = vector.load %arg4[%c0_5, %c0_6] : memref<1x128xf32, #tpu.memory_space<vmem>>, vector<1x128xf32>
    %7 = vector.broadcast %6 : vector<1x128xf32> to vector<512x128xf32>
    %8 = arith.addf %5, %7 : vector<512x128xf32>
    %cst_7 = arith.constant 0.000000e+00 : f32
    %9 = vector.broadcast %cst_7 : f32 to vector<512x128xf32>
    %10 = arith.maximumf %8, %9 : vector<512x128xf32>
    %c0_8 = arith.constant 0 : index
    %c0_9 = arith.constant 0 : index
    %11 = vector.load %arg5[%c0_8, %c0_9] : memref<512x128xf32, #tpu.memory_space<vmem>>, vector<512x128xf32>
    tpu.vector_store %arg5[%c0_8, %c0_9], %10 {strides = array<i32>} : memref<512x128xf32, #tpu.memory_space<vmem>>, vector<512x128xf32>,
    return
  }
  func.func @transform_0(%arg0: i32) -> (i32, i32) {
    %c0_i32 = arith.constant 0 : i32
    %c0_i32_0 = arith.constant 0 : i32
    return %arg0, %c0_i32 : i32, i32
  }
  func.func @transform_1(%arg0: i32) -> (i32, i32) {
    %c0_i32 = arith.constant 0 : i32
    %c0_i32_0 = arith.constant 0 : i32
    %c0_i32_1 = arith.constant 0 : i32
    return %c0_i32, %c0_i32_0 : i32, i32
  }
  func.func @transform_2(%arg0: i32) -> (i32, i32) {
    %c0_i32 = arith.constant 0 : i32
    %c0_i32_0 = arith.constant 0 : i32
    %c0_i32_1 = arith.constant 0 : i32
    return %c0_i32, %c0_i32_0 : i32, i32
  }
  func.func @transform_3(%arg0: i32) -> (i32, i32) {
    %c0_i32 = arith.constant 0 : i32
    %c0_i32_0 = arith.constant 0 : i32
    %c0_i32_1 = arith.constant 0 : i32
    return %c0_i32, %c0_i32_0 : i32, i32
  }
  func.func @transform_4(%arg0: i32) -> (i32, i32) {
    %c0_i32 = arith.constant 0 : i32
    %c0_i32_0 = arith.constant 0 : i32
    return %arg0, %c0_i32 : i32, i32
  }
}

</mosaic_0001>

<llo_original>
// kernel: squeeze.20
$region0: #{squeeze.20}
  %s0 = inlined_call_operand.vmem [shape: f32[128], index: 0, kind: input, shape index: {}]
  %s1 = inlined_call_operand.vmem [shape: f32[4,32], index: 1, kind: output, shape index: {}]
  $region1: #{squeeze.20} parent=0
    #allocation0 [shape = 'u8[4096]{0}', space=vmem, size = 0x1000, scoped, tag = 'scoped mem for output reshape']
    #allocation1 [shape = 'u8[4096]{0}', space=vmem, size = 0x1000, scoped, tag = 'scoped mem for input reshape']
    %s3 = sshllo.u32 0, 1
    %v4 = vld [vmem:[%s0] sm:%s3]
    %5 = vst [vmem:[#allocation1] sm:%s3] %v4
    %v6 = vld [vmem:[#allocation1] sm:$0x1]
    %vm7 = vcmask 261120
    %8 = vst.msk [vmem:[#allocation0] sm:$0x1] %vm7, %v6
    %v9 = vld [vmem:[#allocation1] sm:$0x1]
    %10 = vrot.lane.b32.xlu0 %v9, 96
    %v11 = vpop.permute.xlu0 %10
    %vm12 = vcmask 261120
    %s13 = scalar_lea.vmem [#allocation0], 1
    %14 = vst.msk [vmem:[%s13] sm:$0x1] %vm12, %v11
    %v15 = vld [vmem:[#allocation1] sm:$0x1]
    %16 = vrot.lane.b32.xlu0 %v15, 64
    %v17 = vpop.permute.xlu0 %16
    %vm18 = vcmask 261120
    %s19 = scalar_lea.vmem [#allocation0], 2
    %20 = vst.msk [vmem:[%s19] sm:$0x1] %vm18, %v17
    %v21 = vld [vmem:[#allocation1] sm:$0x1]
    %22 = vrot.lane.b32.xlu0 %v21, 32
    %v23 = vpop.permute.xlu0 %22
    %vm24 = vcmask 261120
    %s25 = scalar_lea.vmem [#allocation0], 3
    %26 = vst.msk [vmem:[%s25] sm:$0x1] %vm24, %v23
    %s28 = sshllo.u32 0, 4
    %v30 = vld [vmem:[#allocation0] sm:%s28]
    %s31 = sshllo.u32 0, 4
    %32 = vst [vmem:[%s1] sm:%s31] %v30

// kernel: tile.18
$region0: #{tile.18}
  #allocation0 [shape = 's32[1]{0}', space=sflag, size = 0x4, scoped, tag = 'scoped memory for tile.18']
  %s0 = inlined_call_operand.vmem [shape: f32[32], index: 0, kind: input, shape index: {}]
  %s1 = inlined_call_operand.vmem [shape: f32[4,32], index: 1, kind: output, shape index: {}]
  // Predicated region
  $region2: #{tile.18} parent=0 // pred_check
    _
  $region3: #{tile.18} parent=0 // pred_check_branch
    %3 = sbr.rel (0) target = $region5
  $region4: #{tile.18} parent=0 // pred_region
    _
  $region5: #{tile.18} parent=0 // pred_fallthru
    _
  %v4 = vld [vmem:[%s0] ss:$0 sm:$0xff]
  %5 = vst [vmem:[%s1] sm:$0xf] %v4

// kernel: tile.19
$region0: #{tile.19}
  %s0 = inlined_call_operand.vmem [shape: f32[4,32], index: 0, kind: input, shape index: {}]
  %s1 = inlined_call_operand.vmem [shape: f32[1,128], index: 1, kind: output, shape index: {}]
  $region1: #{tile.19} parent=0
    #allocation0 [shape = 'u8[4096]{0}', space=vmem, size = 0x1000, scoped, tag = 'scoped mem for output reshape']
    #allocation1 [shape = 'u8[4096]{0}', space=vmem, size = 0x1000, scoped, tag = 'scoped mem for input reshape']
    %s3 = sshllo.u32 0, 4
    %v4 = vld [vmem:[%s0] sm:%s3]
    %5 = vst [vmem:[#allocation1] sm:%s3] %v4
    %v6 = vld [vmem:[#allocation1] sm:$0x1]
    %vm7 = vcmask 261120
    %8 = vst.msk [vmem:[#allocation0] sm:$0x1] %vm7, %v6
    %s9 = scalar_lea.vmem [#allocation1], 3
    %v10 = vld [vmem:[%s9] sm:$0x1]
    %11 = vrot.lane.b32.xlu0 %v10, 96
    %v12 = vpop.permute.xlu0 %11
    %vm13 = vcmask 1048320
    %14 = vst.msk [vmem:[#allocation0] sm:$0x1] %vm13, %v12
    %s15 = scalar_lea.vmem [#allocation1], 2
    %v16 = vld [vmem:[%s15] sm:$0x1]
    %17 = vrot.lane.b32.xlu0 %v16, 64
    %v18 = vpop.permute.xlu0 %17
    %vm19 = vcmask 785920
    %20 = vst.msk [vmem:[#allocation0] sm:$0x1] %vm19, %v18
    %s21 = scalar_lea.vmem [#allocation1], 1
    %v22 = vld [vmem:[%s21] sm:$0x1]
    %23 = vrot.lane.b32.xlu0 %v22, 32
    %v24 = vpop.permute.xlu0 %23
    %vm25 = vcmask 523520
    %26 = vst.msk [vmem:[#allocation0] sm:$0x1] %vm25, %v24
    %s28 = sshllo.u32 0, 1
    %v30 = vld [vmem:[#allocation0] sm:%s28]
    %s31 = sshllo.u32 0, 1
    %32 = vst [vmem:[%s1] sm:%s31] %v30

// kernel: up_forward.2
$region0: #{up_forward.2}
  #allocation0 [shape = 'u32[]', space=smem, size = 0x4, offset = 0x4, fixed_abs, tag = 'smem constant byte address 0x4 - core index']
  #allocation1 [shape = 'u32[144,128]{1,0:T(1,128)}', space=vmem, size = 0x12000, scoped, tag = 'internal scratch']
  %s0 = inlined_call_operand.vmem [shape: bf16[512,256], index: 0, kind: input, shape index: {}]
  %s1 = inlined_call_operand.vmem [shape: bf16[256,128], index: 1, kind: input, shape index: {}]
  %s2 = inlined_call_operand.vmem [shape: f32[1,2,128], index: 2, kind: output, shape index: {}]
  %s3 = sld [smem:[#allocation0]]
  $region18: #{up_forward.2} parent=0
    _
  %s5 = ssub.s32 1, %s3
  %s6 = scalar_select 0, %s5, %s3
  // Predicated region
  $region2: #{up_forward.2} parent=0 // pred_check
    _
  $region3: #{up_forward.2} parent=0 // pred_check_branch
    %8 = sbr.rel (0) target = $region5
  $region4: #{up_forward.2} parent=0 // pred_region
    _
  $region5: #{up_forward.2} parent=0 // pred_fallthru
    _
  // Predicated region
  $region6: #{up_forward.2} parent=0 // pred_check
    _
  $region7: #{up_forward.2} parent=0 // pred_check_branch
    %10 = sbr.rel (0) target = $region9
  $region8: #{up_forward.2} parent=0 // pred_region
    _
  $region9: #{up_forward.2} parent=0 // pred_fallthru
    _
  %v12 = vld [vmem:[%s0] sm:$0xff]
  %v13 = vld [vmem:[%s0 + $0x8] sm:$0xff]
  %v14 = vld [vmem:[%s0 + $0x10] sm:$0xff]
  %v15 = vld [vmem:[%s0 + $0x18] sm:$0xff]
  %v16 = vld [vmem:[%s0 + $0x20] sm:$0xff]
  %v17 = vld [vmem:[%s0 + $0x28] sm:$0xff]
  %v18 = vld [vmem:[%s0 + $0x30] sm:$0xff]
  %v19 = vld [vmem:[%s0 + $0x38] sm:$0xff]
  %v20 = vld [vmem:[%s0 + $0x40] sm:$0xff]
  %v21 = vld [vmem:[%s0 + $0x48] sm:$0xff]
  %v22 = vld [vmem:[%s0 + $0x50] sm:$0xff]
  %v23 = vld [vmem:[%s0 + $0x58] sm:$0xff]
  %v24 = vld [vmem:[%s0 + $0x60] sm:$0xff]
  %v25 = vld [vmem:[%s0 + $0x68] sm:$0xff]
  %v26 = vld [vmem:[%s0 + $0x70] sm:$0xff]
  %v27 = vld [vmem:[%s0 + $0x78] sm:$0xff]
  %v28 = vld [vmem:[%s0 + $0x80] sm:$0xff]
  %v29 = vld [vmem:[%s0 + $0x88] sm:$0xff]
  %v30 = vld [vmem:[%s0 + $0x90] sm:$0xff]
  %v31 = vld [vmem:[%s0 + $0x98] sm:$0xff]
  %v32 = vld [vmem:[%s0 + $0xa0] sm:$0xff]
  %v33 = vld [vmem:[%s0 + $0xa8] sm:$0xff]
  %v34 = vld [vmem:[%s0 + $0xb0] sm:$0xff]
  %v35 = vld [vmem:[%s0 + $0xb8] sm:$0xff]
  %v36 = vld [vmem:[%s0 + $0xc0] sm:$0xff]
  %v37 = vld [vmem:[%s0 + $0xc8] sm:$0xff]
  %v38 = vld [vmem:[%s0 + $0xd0] sm:$0xff]
  %v39 = vld [vmem:[%s0 + $0xd8] sm:$0xff]
  %v40 = vld [vmem:[%s0 + $0xe0] sm:$0xff]
  %v41 = vld [vmem:[%s0 + $0xe8] sm:$0xff]
  %v42 = vld [vmem:[%s0 + $0xf0] sm:$0xff]
  %v43 = vld [vmem:[%s0 + $0xf8] sm:$0xff]
  %v44 = vld [vmem:[%s0 + $0x100] sm:$0xff]
  %v45 = vld [vmem:[%s0 + $0x108] sm:$0xff]
  %v46 = vld [vmem:[%s0 + $0x110] sm:$0xff]
  %v47 = vld [vmem:[%s0 + $0x118] sm:$0xff]
  %v48 = vld [vmem:[%s0 + $0x120] sm:$0xff]
  %v49 = vld [vmem:[%s0 + $0x128] sm:$0xff]
  %v50 = vld [vmem:[%s0 + $0x130] sm:$0xff]
  %v51 = vld [vmem:[%s0 + $0x138] sm:$0xff]
  %v52 = vld [vmem:[%s0 + $0x140] sm:$0xff]
  %v53 = vld [vmem:[%s0 + $0x148] sm:$0xff]
  %v54 = vld [vmem:[%s0 + $0x150] sm:$0xff]
  %v55 = vld [vmem:[%s0 + $0x158] sm:$0xff]
  %v56 = vld [vmem:[%s0 + $0x160] sm:$0xff]
  %v57 = vld [vmem:[%s0 + $0x168] sm:$0xff]
  %v58 = vld [vmem:[%s0 + $0x170] sm:$0xff]
  %v59 = vld [vmem:[%s0 + $0x178] sm:$0xff]
  %v60 = vld [vmem:[%s0 + $0x180] sm:$0xff]
  %v61 = vld [vmem:[%s0 + $0x188] sm:$0xff]
  %v62 = vld [vmem:[%s0 + $0x190] sm:$0xff]
  %v63 = vld [vmem:[%s0 + $0x198] sm:$0xff]
  %v64 = vld [vmem:[%s0 + $0x1a0] sm:$0xff]
  %v65 = vld [vmem:[%s0 + $0x1a8] sm:$0xff]
  %v66 = vld [vmem:[%s0 + $0x1b0] sm:$0xff]
  %v67 = vld [vmem:[%s0 + $0x1b8] sm:$0xff]
  %v68 = vld [vmem:[%s0 + $0x1c0] sm:$0xff]
  %v69 = vld [vmem:[%s0 + $0x1c8] sm:$0xff]
  %v70 = vld [vmem:[%s0 + $0x1d0] sm:$0xff]
  %v71 = vld [vmem:[%s0 + $0x1d8] sm:$0xff]
  %v72 = vld [vmem:[%s0 + $0x1e0] sm:$0xff]
  %v73 = vld [vmem:[%s0 + $0x1e8] sm:$0xff]
  %v74 = vld [vmem:[%s0 + $0x1f0] sm:$0xff]
  %v75 = vld [vmem:[%s0 + $0x1f8] sm:$0xff]
  %v76 = vld [vmem:[%s1] sm:$0xf]
  %v77 = vld [vmem:[%s1 + $0x4] sm:$0xf]
  %v78 = vld [vmem:[%s1 + $0x8] sm:$0xf]
  %v79 = vld [vmem:[%s1 + $0xc] sm:$0xf]
  %v80 = vld [vmem:[%s1 + $0x10] sm:$0xf]
  %v81 = vld [vmem:[%s1 + $0x14] sm:$0xf]
  %v82 = vld [vmem:[%s1 + $0x18] sm:$0xf]
  %v83 = vld [vmem:[%s1 + $0x1c] sm:$0xf]
  %v84 = vld [vmem:[%s1 + $0x20] sm:$0xf]
  %v85 = vld [vmem:[%s1 + $0x24] sm:$0xf]
  %v86 = vld [vmem:[%s1 + $0x28] sm:$0xf]
  %v87 = vld [vmem:[%s1 + $0x2c] sm:$0xf]
  %v88 = vld [vmem:[%s1 + $0x30] sm:$0xf]
  %v89 = vld [vmem:[%s1 + $0x34] sm:$0xf]
  %v90 = vld [vmem:[%s1 + $0x38] sm:$0xf]
  %v91 = vld [vmem:[%s1 + $0x3c] sm:$0xf]
  %v92 = vld [vmem:[%s1 + $0x40] sm:$0xf]
  %v93 = vld [vmem:[%s1 + $0x44] sm:$0xf]
  %v94 = vld [vmem:[%s1 + $0x48] sm:$0xf]
  %v95 = vld [vmem:[%s1 + $0x4c] sm:$0xf]
  %v96 = vld [vmem:[%s1 + $0x50] sm:$0xf]
  %v97 = vld [vmem:[%s1 + $0x54] sm:$0xf]
  %v98 = vld [vmem:[%s1 + $0x58] sm:$0xf]
  %v99 = vld [vmem:[%s1 + $0x5c] sm:$0xf]
  %v100 = vld [vmem:[%s1 + $0x60] sm:$0xf]
  %v101 = vld [vmem:[%s1 + $0x64] sm:$0xf]
  %v102 = vld [vmem:[%s1 + $0x68] sm:$0xf]
  %v103 = vld [vmem:[%s1 + $0x6c] sm:$0xf]
  %v104 = vld [vmem:[%s1 + $0x70] sm:$0xf]
  %v105 = vld [vmem:[%s1 + $0x74] sm:$0xf]
  %v106 = vld [vmem:[%s1 + $0x78] sm:$0xf]
  %v107 = vld [vmem:[%s1 + $0x7c] sm:$0xf]
  %v172 = vunpack.c.l.b16 %v12
  %v173 = vunpack.c.h.b16 %v12
  %v174 = vunpack.c.l.b16 %v13
  %v175 = vunpack.c.h.b16 %v13
  %v176 = vunpack.c.l.b16 %v14
  %v177 = vunpack.c.h.b16 %v14
  %v178 = vunpack.c.l.b16 %v15
  %v179 = vunpack.c.h.b16 %v15
  %v180 = vunpack.c.l.b16 %v16
  %v181 = vunpack.c.h.b16 %v16
  %v182 = vunpack.c.l.b16 %v17
  %v183 = vunpack.c.h.b16 %v17
  %v184 = vunpack.c.l.b16 %v18
  %v185 = vunpack.c.h.b16 %v18
  %v186 = vunpack.c.l.b16 %v19
  %v187 = vunpack.c.h.b16 %v19
  %v188 = vunpack.c.l.b16 %v20
  %v189 = vunpack.c.h.b16 %v20
  %v190 = vunpack.c.l.b16 %v21
  %v191 = vunpack.c.h.b16 %v21
  %v192 = vunpack.c.l.b16 %v22
  %v193 = vunpack.c.h.b16 %v22
  %v194 = vunpack.c.l.b16 %v23
  %v195 = vunpack.c.h.b16 %v23
  %v196 = vunpack.c.l.b16 %v24
  %v197 = vunpack.c.h.b16 %v24
  %v198 = vunpack.c.l.b16 %v25
  %v199 = vunpack.c.h.b16 %v25
  %v200 = vunpack.c.l.b16 %v26
  %v201 = vunpack.c.h.b16 %v26
  %v202 = vunpack.c.l.b16 %v27
  %v203 = vunpack.c.h.b16 %v27
  %v204 = vunpack.c.l.b16 %v28
  %v205 = vunpack.c.h.b16 %v28
  %v206 = vunpack.c.l.b16 %v29
  %v207 = vunpack.c.h.b16 %v29
  %v208 = vunpack.c.l.b16 %v30
  %v209 = vunpack.c.h.b16 %v30
  %v210 = vunpack.c.l.b16 %v31
  %v211 = vunpack.c.h.b16 %v31
  %v212 = vunpack.c.l.b16 %v32
  %v213 = vunpack.c.h.b16 %v32
  %v214 = vunpack.c.l.b16 %v33
  %v215 = vunpack.c.h.b16 %v33
  %v216 = vunpack.c.l.b16 %v34
  %v217 = vunpack.c.h.b16 %v34
  %v218 = vunpack.c.l.b16 %v35
  %v219 = vunpack.c.h.b16 %v35
  %v220 = vunpack.c.l.b16 %v36
  %v221 = vunpack.c.h.b16 %v36
  %v222 = vunpack.c.l.b16 %v37
  %v223 = vunpack.c.h.b16 %v37
  %v224 = vunpack.c.l.b16 %v38
  %v225 = vunpack.c.h.b16 %v38
  %v226 = vunpack.c.l.b16 %v39
  %v227 = vunpack.c.h.b16 %v39
  %v228 = vunpack.c.l.b16 %v40
  %v229 = vunpack.c.h.b16 %v40
  %v230 = vunpack.c.l.b16 %v41
  %v231 = vunpack.c.h.b16 %v41
  %v232 = vunpack.c.l.b16 %v42
  %v233 = vunpack.c.h.b16 %v42
  %v234 = vunpack.c.l.b16 %v43
  %v235 = vunpack.c.h.b16 %v43
  %v236 = vunpack.c.l.b16 %v44
  %v237 = vunpack.c.h.b16 %v44
  %v238 = vunpack.c.l.b16 %v45
  %v239 = vunpack.c.h.b16 %v45
  %v240 = vunpack.c.l.b16 %v46
  %v241 = vunpack.c.h.b16 %v46
  %v242 = vunpack.c.l.b16 %v47
  %v243 = vunpack.c.h.b16 %v47
  %v244 = vunpack.c.l.b16 %v48
  %v245 = vunpack.c.h.b16 %v48
  %v246 = vunpack.c.l.b16 %v49
  %v247 = vunpack.c.h.b16 %v49
  %v248 = vunpack.c.l.b16 %v50
  %v249 = vunpack.c.h.b16 %v50
  %v250 = vunpack.c.l.b16 %v51
  %v251 = vunpack.c.h.b16 %v51
  %v252 = vunpack.c.l.b16 %v52
  %v253 = vunpack.c.h.b16 %v52
  %v254 = vunpack.c.l.b16 %v53
  %v255 = vunpack.c.h.b16 %v53
  %v256 = vunpack.c.l.b16 %v54
  %v257 = vunpack.c.h.b16 %v54
  %v258 = vunpack.c.l.b16 %v55
  %v259 = vunpack.c.h.b16 %v55
  %v260 = vunpack.c.l.b16 %v56
  %v261 = vunpack.c.h.b16 %v56
  %v262 = vunpack.c.l.b16 %v57
  %v263 = vunpack.c.h.b16 %v57
  %v264 = vunpack.c.l.b16 %v58
  %v265 = vunpack.c.h.b16 %v58
  %v266 = vunpack.c.l.b16 %v59
  %v267 = vunpack.c.h.b16 %v59
  %v268 = vunpack.c.l.b16 %v60
  %v269 = vunpack.c.h.b16 %v60
  %v270 = vunpack.c.l.b16 %v61
  %v271 = vunpack.c.h.b16 %v61
  %v272 = vunpack.c.l.b16 %v62
  %v273 = vunpack.c.h.b16 %v62
  %v274 = vunpack.c.l.b16 %v63
  %v275 = vunpack.c.h.b16 %v63
  %v276 = vunpack.c.l.b16 %v64
  %v277 = vunpack.c.h.b16 %v64
  %v278 = vunpack.c.l.b16 %v65
  %v279 = vunpack.c.h.b16 %v65
  %v280 = vunpack.c.l.b16 %v66
  %v281 = vunpack.c.h.b16 %v66
  %v282 = vunpack.c.l.b16 %v67
  %v283 = vunpack.c.h.b16 %v67
  %v284 = vunpack.c.l.b16 %v68
  %v285 = vunpack.c.h.b16 %v68
  %v286 = vunpack.c.l.b16 %v69
  %v287 = vunpack.c.h.b16 %v69
  %v288 = vunpack.c.l.b16 %v70
  %v289 = vunpack.c.h.b16 %v70
  %v290 = vunpack.c.l.b16 %v71
  %v291 = vunpack.c.h.b16 %v71
  %v292 = vunpack.c.l.b16 %v72
  %v293 = vunpack.c.h.b16 %v72
  %v294 = vunpack.c.l.b16 %v73
  %v295 = vunpack.c.h.b16 %v73
  %v296 = vunpack.c.l.b16 %v74
  %v297 = vunpack.c.h.b16 %v74
  %v298 = vunpack.c.l.b16 %v75
  %v299 = vunpack.c.h.b16 %v75
  %v300 = vpack.c.b16 %v174, %v172
  %v301 = vpack.c.b16 %v175, %v173
  %v302 = vpack.c.b16 %v178, %v176
  %v303 = vpack.c.b16 %v179, %v177
  %v304 = vpack.c.b16 %v182, %v180
  %v305 = vpack.c.b16 %v183, %v181
  %v306 = vpack.c.b16 %v186, %v184
  %v307 = vpack.c.b16 %v187, %v185
  %v308 = vpack.c.b16 %v190, %v188
  %v309 = vpack.c.b16 %v191, %v189
  %v310 = vpack.c.b16 %v194, %v192
  %v311 = vpack.c.b16 %v195, %v193
  %v312 = vpack.c.b16 %v198, %v196
  %v313 = vpack.c.b16 %v199, %v197
  %v314 = vpack.c.b16 %v202, %v200
  %v315 = vpack.c.b16 %v203, %v201
  %v316 = vpack.c.b16 %v206, %v204
  %v317 = vpack.c.b16 %v207, %v205
  %v318 = vpack.c.b16 %v210, %v208
  %v319 = vpack.c.b16 %v211, %v209
  %v320 = vpack.c.b16 %v214, %v212
  %v321 = vpack.c.b16 %v215, %v213
  %v322 = vpack.c.b16 %v218, %v216
  %v323 = vpack.c.b16 %v219, %v217
  %v324 = vpack.c.b16 %v222, %v220
  %v325 = vpack.c.b16 %v223, %v221
  %v326 = vpack.c.b16 %v226, %v224
  %v327 = vpack.c.b16 %v227, %v225
  %v328 = vpack.c.b16 %v230, %v228
  %v329 = vpack.c.b16 %v231, %v229
  %v330 = vpack.c.b16 %v234, %v232
  %v331 = vpack.c.b16 %v235, %v233
  %v332 = vpack.c.b16 %v238, %v236
  %v333 = vpack.c.b16 %v239, %v237
  %v334 = vpack.c.b16 %v242, %v240
  %v335 = vpack.c.b16 %v243, %v241
  %v336 = vpack.c.b16 %v246, %v244
  %v337 = vpack.c.b16 %v247, %v245
  %v338 = vpack.c.b16 %v250, %v248
  %v339 = vpack.c.b16 %v251, %v249
  %v340 = vpack.c.b16 %v254, %v252
  %v341 = vpack.c.b16 %v255, %v253
  %v342 = vpack.c.b16 %v258, %v256
  %v343 = vpack.c.b16 %v259, %v257
  %v344 = vpack.c.b16 %v262, %v260
  %v345 = vpack.c.b16 %v263, %v261
  %v346 = vpack.c.b16 %v266, %v264
  %v347 = vpack.c.b16 %v267, %v265
  %v348 = vpack.c.b16 %v270, %v268
  %v349 = vpack.c.b16 %v271, %v269
  %v350 = vpack.c.b16 %v274, %v272
  %v351 = vpack.c.b16 %v275, %v273
  %v352 = vpack.c.b16 %v278, %v276
  %v353 = vpack.c.b16 %v279, %v277
  %v354 = vpack.c.b16 %v282, %v280
  %v355 = vpack.c.b16 %v283, %v281
  %v356 = vpack.c.b16 %v286, %v284
  %v357 = vpack.c.b16 %v287, %v285
  %v358 = vpack.c.b16 %v290, %v288
  %v359 = vpack.c.b16 %v291, %v289
  %v360 = vpack.c.b16 %v294, %v292
  %v361 = vpack.c.b16 %v295, %v293
  %v362 = vpack.c.b16 %v298, %v296
  %v363 = vpack.c.b16 %v299, %v297
  %v460 = vunpack.c.l.b16 %v76
  %v461 = vunpack.c.l.b16 %v77
  %v462 = vunpack.c.l.b16 %v78
  %v463 = vunpack.c.l.b16 %v79
  %v464 = vunpack.c.l.b16 %v80
  %v465 = vunpack.c.l.b16 %v81
  %v466 = vunpack.c.l.b16 %v82
  %v467 = vunpack.c.l.b16 %v83
  %v468 = vunpack.c.l.b16 %v84
  %v469 = vunpack.c.l.b16 %v85
  %v470 = vunpack.c.l.b16 %v86
  %v471 = vunpack.c.l.b16 %v87
  %v472 = vunpack.c.l.b16 %v88
  %v473 = vunpack.c.l.b16 %v89
  %v474 = vunpack.c.l.b16 %v90
  %v475 = vunpack.c.l.b16 %v91
  %v476 = vunpack.c.l.b16 %v92
  %v477 = vunpack.c.l.b16 %v93
  %v478 = vunpack.c.l.b16 %v94
  %v479 = vunpack.c.l.b16 %v95
  %v480 = vunpack.c.l.b16 %v96
  %v481 = vunpack.c.l.b16 %v97
  %v482 = vunpack.c.l.b16 %v98
  %v483 = vunpack.c.l.b16 %v99
  %v484 = vunpack.c.l.b16 %v100
  %v485 = vunpack.c.l.b16 %v101
  %v486 = vunpack.c.l.b16 %v102
  %v487 = vunpack.c.l.b16 %v103
  %v488 = vunpack.c.l.b16 %v104
  %v489 = vunpack.c.l.b16 %v105
  %v490 = vunpack.c.l.b16 %v106
  %v491 = vunpack.c.l.b16 %v107
  %v492 = vpack.c.b16 %v461, %v460
  %v493 = vpack.c.b16 %v463, %v462
  %v494 = vpack.c.b16 %v465, %v464
  %v495 = vpack.c.b16 %v467, %v466
  %v496 = vpack.c.b16 %v469, %v468
  %v497 = vpack.c.b16 %v471, %v470
  %v498 = vpack.c.b16 %v473, %v472
  %v499 = vpack.c.b16 %v475, %v474
  %v500 = vpack.c.b16 %v477, %v476
  %v501 = vpack.c.b16 %v479, %v478
  %v502 = vpack.c.b16 %v481, %v480
  %v503 = vpack.c.b16 %v483, %v482
  %v504 = vpack.c.b16 %v485, %v484
  %v505 = vpack.c.b16 %v487, %v486
  %v506 = vpack.c.b16 %v489, %v488
  %v507 = vpack.c.b16 %v491, %v490
  %524 = vmatprep.subr.bf16.mxu0 0
  %525 = vmatpush1.bf16.msra.mxu0 %v492
  %526 = vmatprep.subr.bf16.mxu0 0
  %527 = vmatpush1.bf16.msra.mxu0 %v493
  %528 = vmatprep.subr.bf16.mxu0 0
  %529 = vmatpush1.bf16.msra.mxu0 %v494
  %530 = vmatprep.subr.bf16.mxu0 0
  %531 = vmatpush1.bf16.msra.mxu0 %v495
  %532 = vmatprep.subr.bf16.mxu0 0
  %533 = vmatpush1.bf16.msra.mxu0 %v496
  %534 = vmatprep.subr.bf16.mxu0 0
  %535 = vmatpush1.bf16.msra.mxu0 %v497
  %536 = vmatprep.subr.bf16.mxu0 0
  %537 = vmatpush1.bf16.msra.mxu0 %v498
  %538 = vmatprep.subr.bf16.mxu0 0
  %539 = vmatpush1.bf16.msra.mxu0 %v499
  %540 = vmatprep.subr.bf16.mxu0 0
  %541 = vmatpush1.bf16.msra.mxu0 %v500
  %542 = vmatprep.subr.bf16.mxu0 0
  %543 = vmatpush1.bf16.msra.mxu0 %v501
  %544 = vmatprep.subr.bf16.mxu0 0
  %545 = vmatpush1.bf16.msra.mxu0 %v502
  %546 = vmatprep.subr.bf16.mxu0 0
  %547 = vmatpush1.bf16.msra.mxu0 %v503
  %548 = vmatprep.subr.bf16.mxu0 0
  %549 = vmatpush1.bf16.msra.mxu0 %v504
  %550 = vmatprep.subr.bf16.mxu0 0
  %551 = vmatpush1.bf16.msra.mxu0 %v505
  %552 = vmatprep.subr.bf16.mxu0 0
  %553 = vmatpush1.bf16.msra.mxu0 %v506
  %554 = vmatprep.subr.bf16.mxu0 0
  %555 = vmatpush1.bf16.msra.mxu0 %v507
  %556 = vmatprep.mubr.bf16.mxu0 %v301
  %557 = vmatmul.mubr.bf16.gmra.mrb[0].mxu0 %v300
  %v558 = vpop.f32.mrb[0].mxu0
  %v559 = vadd.f32 0.0, %v558
  %v560 = vpop.f32.mrb[0].mxu0
  %v561 = vpop.f32.mrb[0].mxu0
  %v562 = vadd.f32 0.0, %v561
  %v563 = vpop.f32.mrb[0].mxu0
  %564 = vmatprep.mubr.bf16.mxu0 %v303
  %565 = vmatmul.mubr.bf16.gmra.mrb[0].mxu0 %v302
  %v566 = vpop.f32.mrb[0].mxu0
  %v567 = vadd.f32 0.0, %v566
  %v568 = vpop.f32.mrb[0].mxu0
  %v569 = vpop.f32.mrb[0].mxu0
  %v570 = vadd.f32 0.0, %v569
  %v571 = vpop.f32.mrb[0].mxu0
  %572 = vmatprep.mubr.bf16.mxu0 %v305
  %573 = vmatmul.mubr.bf16.gmra.mrb[0].mxu0 %v304
  %v574 = vpop.f32.mrb[0].mxu0
  %v575 = vadd.f32 0.0, %v574
  %v576 = vpop.f32.mrb[0].mxu0
  %v577 = vpop.f32.mrb[0].mxu0
  %v578 = vadd.f32 0.0, %v577
  %v579 = vpop.f32.mrb[0].mxu0
  %580 = vmatprep.mubr.bf16.mxu0 %v307
  %581 = vmatmul.mubr.bf16.gmra.mrb[0].mxu0 %v306
  %v582 = vpop.f32.mrb[0].mxu0
  %v583 = vadd.f32 0.0, %v582
  %v584 = vpop.f32.mrb[0].mxu0
  %v585 = vpop.f32.mrb[0].mxu0
  %v586 = vadd.f32 0.0, %v585
  %v587 = vpop.f32.mrb[0].mxu0
  %588 = vmatprep.mubr.bf16.mxu0 %v309
  %589 = vmatmul.mubr.bf16.gmra.mrb[0].mxu0 %v308
  %v590 = vpop.f32.mrb[0].mxu0
  %v591 = vadd.f32 0.0, %v590
  %v592 = vpop.f32.mrb[0].mxu0
  %v593 = vpop.f32.mrb[0].mxu0
  %v594 = vadd.f32 0.0, %v593
  %v595 = vpop.f32.mrb[0].mxu0
  %596 = vmatprep.mubr.bf16.mxu0 %v311
  %597 = vmatmul.mubr.bf16.gmra.mrb[0].mxu0 %v310
  %v598 = vpop.f32.mrb[0].mxu0
  %v599 = vadd.f32 0.0, %v598
  %v600 = vpop.f32.mrb[0].mxu0
  %v601 = vpop.f32.mrb[0].mxu0
  %v602 = vadd.f32 0.0, %v601
  %v603 = vpop.f32.mrb[0].mxu0
  %604 = vmatprep.mubr.bf16.mxu0 %v313
  %605 = vmatmul.mubr.bf16.gmra.mrb[0].mxu0 %v312
  %v606 = vpop.f32.mrb[0].mxu0
  %v607 = vadd.f32 0.0, %v606
  %v608 = vpop.f32.mrb[0].mxu0
  %v609 = vpop.f32.mrb[0].mxu0
  %v610 = vadd.f32 0.0, %v609
  %v611 = vpop.f32.mrb[0].mxu0
  %612 = vmatprep.mubr.bf16.mxu0 %v315
  %613 = vmatmul.mubr.bf16.gmra.mrb[0].mxu0 %v314
  %v614 = vpop.f32.mrb[0].mxu0
  %v615 = vadd.f32 0.0, %v614
  %v616 = vpop.f32.mrb[0].mxu0
  %v617 = vpop.f32.mrb[0].mxu0
  %v618 = vadd.f32 0.0, %v617
  %v619 = vpop.f32.mrb[0].mxu0
  %620 = vmatprep.mubr.bf16.mxu0 %v317
  %621 = vmatmul.mubr.bf16.gmra.mrb[0].mxu0 %v316
  %v622 = vpop.f32.mrb[0].mxu0
  %v623 = vadd.f32 0.0, %v622
  %v624 = vpop.f32.mrb[0].mxu0
  %v625 = vpop.f32.mrb[0].mxu0
  %v626 = vadd.f32 0.0, %v625
  %v627 = vpop.f32.mrb[0].mxu0
  %628 = vmatprep.mubr.bf16.mxu0 %v319
  %629 = vmatmul.mubr.bf16.gmra.mrb[0].mxu0 %v318
  %v630 = vpop.f32.mrb[0].mxu0
  %v631 = vadd.f32 0.0, %v630
  %v632 = vpop.f32.mrb[0].mxu0
  %v633 = vpop.f32.mrb[0].mxu0
  %v634 = vadd.f32 0.0, %v633
  %v635 = vpop.f32.mrb[0].mxu0
  %636 = vmatprep.mubr.bf16.mxu0 %v321
  %637 = vmatmul.mubr.bf16.gmra.mrb[0].mxu0 %v320
  %v638 = vpop.f32.mrb[0].mxu0
  %v639 = vadd.f32 0.0, %v638
  %v640 = vpop.f32.mrb[0].mxu0
  %v641 = vpop.f32.mrb[0].mxu0
  %v642 = vadd.f32 0.0, %v641
  %v643 = vpop.f32.mrb[0].mxu0
  %644 = vmatprep.mubr.bf16.mxu0 %v323
  %645 = vmatmul.mubr.bf16.gmra.mrb[0].mxu0 %v322
  %v646 = vpop.f32.mrb[0].mxu0
  %v647 = vadd.f32 0.0, %v646
  %v648 = vpop.f32.mrb[0].mxu0
  %v649 = vpop.f32.mrb[0].mxu0
  %v650 = vadd.f32 0.0, %v649
  %v651 = vpop.f32.mrb[0].mxu0
  %652 = vmatprep.mubr.bf16.mxu0 %v325
  %653 = vmatmul.mubr.bf16.gmra.mrb[0].mxu0 %v324
  %v654 = vpop.f32.mrb[0].mxu0
  %v655 = vadd.f32 0.0, %v654
  %v656 = vpop.f32.mrb[0].mxu0
  %v657 = vpop.f32.mrb[0].mxu0
  %v658 = vadd.f32 0.0, %v657
  %v659 = vpop.f32.mrb[0].mxu0
  %660 = vmatprep.mubr.bf16.mxu0 %v327
  %661 = vmatmul.mubr.bf16.gmra.mrb[0].mxu0 %v326
  %v662 = vpop.f32.mrb[0].mxu0
  %v663 = vadd.f32 0.0, %v662
  %v664 = vpop.f32.mrb[0].mxu0
  %v665 = vpop.f32.mrb[0].mxu0
  %v666 = vadd.f32 0.0, %v665
  %v667 = vpop.f32.mrb[0].mxu0
  %668 = vmatprep.mubr.bf16.mxu0 %v329
  %669 = vmatmul.mubr.bf16.gmra.mrb[0].mxu0 %v328
  %v670 = vpop.f32.mrb[0].mxu0
  %v671 = vadd.f32 0.0, %v670
  %v672 = vpop.f32.mrb[0].mxu0
  %v673 = vpop.f32.mrb[0].mxu0
  %v674 = vadd.f32 0.0, %v673
  %v675 = vpop.f32.mrb[0].mxu0
  %676 = vmatprep.mubr.bf16.mxu0 %v331
  %677 = vmatmul.mubr.bf16.gmra.mrb[0].mxu0 %v330
  %v678 = vpop.f32.mrb[0].mxu0
  %v679 = vadd.f32 0.0, %v678
  %v680 = vpop.f32.mrb[0].mxu0
  %v681 = vpop.f32.mrb[0].mxu0
  %v682 = vadd.f32 0.0, %v681
  %v683 = vpop.f32.mrb[0].mxu0
  %684 = vmatprep.mubr.bf16.mxu0 %v333
  %685 = vmatmul.mubr.bf16.gmra.mrb[0].mxu0 %v332
  %v686 = vpop.f32.mrb[0].mxu0
  %v687 = vadd.f32 0.0, %v686
  %v688 = vpop.f32.mrb[0].mxu0
  %v689 = vpop.f32.mrb[0].mxu0
  %v690 = vadd.f32 0.0, %v689
  %v691 = vpop.f32.mrb[0].mxu0
  %692 = vmatprep.mubr.bf16.mxu0 %v335
  %693 = vmatmul.mubr.bf16.gmra.mrb[0].mxu0 %v334
  %v694 = vpop.f32.mrb[0].mxu0
  %v695 = vadd.f32 0.0, %v694
  %v696 = vpop.f32.mrb[0].mxu0
  %v697 = vpop.f32.mrb[0].mxu0
  %v698 = vadd.f32 0.0, %v697
  %v699 = vpop.f32.mrb[0].mxu0
  %700 = vmatprep.mubr.bf16.mxu0 %v337
  %701 = vmatmul.mubr.bf16.gmra.mrb[0].mxu0 %v336
  %v702 = vpop.f32.mrb[0].mxu0
  %v703 = vadd.f32 0.0, %v702
  %v704 = vpop.f32.mrb[0].mxu0
  %v705 = vpop.f32.mrb[0].mxu0
  %v706 = vadd.f32 0.0, %v705
  %v707 = vpop.f32.mrb[0].mxu0
  %708 = vmatprep.mubr.bf16.mxu0 %v339
  %709 = vmatmul.mubr.bf16.gmra.mrb[0].mxu0 %v338
  %v710 = vpop.f32.mrb[0].mxu0
  %v711 = vadd.f32 0.0, %v710
  %v712 = vpop.f32.mrb[0].mxu0
  %v713 = vpop.f32.mrb[0].mxu0
  %v714 = vadd.f32 0.0, %v713
  %v715 = vpop.f32.mrb[0].mxu0
  %716 = vmatprep.mubr.bf16.mxu0 %v341
  %717 = vmatmul.mubr.bf16.gmra.mrb[0].mxu0 %v340
  %v718 = vpop.f32.mrb[0].mxu0
  %v719 = vadd.f32 0.0, %v718
  %v720 = vpop.f32.mrb[0].mxu0
  %v721 = vpop.f32.mrb[0].mxu0
  %v722 = vadd.f32 0.0, %v721
  %v723 = vpop.f32.mrb[0].mxu0
  %724 = vmatprep.mubr.bf16.mxu0 %v343
  %725 = vmatmul.mubr.bf16.gmra.mrb[0].mxu0 %v342
  %v726 = vpop.f32.mrb[0].mxu0
  %v727 = vadd.f32 0.0, %v726
  %v728 = vpop.f32.mrb[0].mxu0
  %v729 = vpop.f32.mrb[0].mxu0
  %v730 = vadd.f32 0.0, %v729
  %v731 = vpop.f32.mrb[0].mxu0
  %732 = vmatprep.mubr.bf16.mxu0 %v345
  %733 = vmatmul.mubr.bf16.gmra.mrb[0].mxu0 %v344
  %v734 = vpop.f32.mrb[0].mxu0
  %v735 = vadd.f32 0.0, %v734
  %v736 = vpop.f32.mrb[0].mxu0
  %v737 = vpop.f32.mrb[0].mxu0
  %v738 = vadd.f32 0.0, %v737
  %v739 = vpop.f32.mrb[0].mxu0
  %740 = vmatprep.mubr.bf16.mxu0 %v347
  %741 = vmatmul.mubr.bf16.gmra.mrb[0].mxu0 %v346
  %v742 = vpop.f32.mrb[0].mxu0
  %v743 = vadd.f32 0.0, %v742
  %v744 = vpop.f32.mrb[0].mxu0
  %v745 = vpop.f32.mrb[0].mxu0
  %v746 = vadd.f32 0.0, %v745
  %v747 = vpop.f32.mrb[0].mxu0
  %748 = vmatprep.mubr.bf16.mxu0 %v349
  %749 = vmatmul.mubr.bf16.gmra.mrb[0].mxu0 %v348
  %v750 = vpop.f32.mrb[0].mxu0
  %v751 = vadd.f32 0.0, %v750
  %v752 = vpop.f32.mrb[0].mxu0
  %v753 = vpop.f32.mrb[0].mxu0
  %v754 = vadd.f32 0.0, %v753
  %v755 = vpop.f32.mrb[0].mxu0
  %756 = vmatprep.mubr.bf16.mxu0 %v351
  %757 = vmatmul.mubr.bf16.gmra.mrb[0].mxu0 %v350
  %v758 = vpop.f32.mrb[0].mxu0
  %v759 = vadd.f32 0.0, %v758
  %v760 = vpop.f32.mrb[0].mxu0
  %v761 = vpop.f32.mrb[0].mxu0
  %v762 = vadd.f32 0.0, %v761
  %v763 = vpop.f32.mrb[0].mxu0
  %764 = vmatprep.mubr.bf16.mxu0 %v353
  %765 = vmatmul.mubr.bf16.gmra.mrb[0].mxu0 %v352
  %v766 = vpop.f32.mrb[0].mxu0
  %v767 = vadd.f32 0.0, %v766
  %v768 = vpop.f32.mrb[0].mxu0
  %v769 = vpop.f32.mrb[0].mxu0
  %v770 = vadd.f32 0.0, %v769
  %v771 = vpop.f32.mrb[0].mxu0
  %772 = vmatprep.mubr.bf16.mxu0 %v355
  %773 = vmatmul.mubr.bf16.gmra.mrb[0].mxu0 %v354
  %v774 = vpop.f32.mrb[0].mxu0
  %v775 = vadd.f32 0.0, %v774
  %v776 = vpop.f32.mrb[0].mxu0
  %v777 = vpop.f32.mrb[0].mxu0
  %v778 = vadd.f32 0.0, %v777
  %v779 = vpop.f32.mrb[0].mxu0
  %780 = vmatprep.mubr.bf16.mxu0 %v357
  %781 = vmatmul.mubr.bf16.gmra.mrb[0].mxu0 %v356
  %v782 = vpop.f32.mrb[0].mxu0
  %v783 = vadd.f32 0.0, %v782
  %v784 = vpop.f32.mrb[0].mxu0
  %v785 = vpop.f32.mrb[0].mxu0
  %v786 = vadd.f32 0.0, %v785
  %v787 = vpop.f32.mrb[0].mxu0
  %788 = vmatprep.mubr.bf16.mxu0 %v359
  %789 = vmatmul.mubr.bf16.gmra.mrb[0].mxu0 %v358
  %v790 = vpop.f32.mrb[0].mxu0
  %v791 = vadd.f32 0.0, %v790
  %v792 = vpop.f32.mrb[0].mxu0
  %v793 = vpop.f32.mrb[0].mxu0
  %v794 = vadd.f32 0.0, %v793
  %v795 = vpop.f32.mrb[0].mxu0
  %796 = vmatprep.mubr.bf16.mxu0 %v361
  %797 = vmatmul.mubr.bf16.gmra.mrb[0].mxu0 %v360
  %v798 = vpop.f32.mrb[0].mxu0
  %v799 = vadd.f32 0.0, %v798
  %v800 = vpop.f32.mrb[0].mxu0
  %v801 = vpop.f32.mrb[0].mxu0
  %v802 = vadd.f32 0.0, %v801
  %v803 = vpop.f32.mrb[0].mxu0
  %804 = vmatprep.mubr.bf16.mxu0 %v363
  %805 = vmatmul.mubr.bf16.gmra.mrb[0].mxu0 %v362
  %v806 = vpop.f32.mrb[0].mxu0
  %v807 = vadd.f32 0.0, %v806
  %v808 = vpop.f32.mrb[0].mxu0
  %v809 = vpop.f32.mrb[0].mxu0
  %v810 = vadd.f32 0.0, %v809
  %v811 = vpop.f32.mrb[0].mxu0
  %812 = vdwg.mxu0
  %v813 = vadd.f32 %v559, %v562
  %v814 = vadd.f32 %v813, %v567
  %v815 = vadd.f32 %v814, %v570
  %v816 = vadd.f32 %v815, %v575
  %v817 = vadd.f32 %v816, %v578
  %v818 = vadd.f32 %v817, %v583
  %v819 = vadd.f32 %v818, %v586
  %v820 = vadd.f32 %v819, %v591
  %v821 = vadd.f32 %v820, %v594
  %v822 = vadd.f32 %v821, %v599
  %v823 = vadd.f32 %v822, %v602
  %v824 = vadd.f32 %v823, %v607
  %v825 = vadd.f32 %v824, %v610
  %v826 = vadd.f32 %v825, %v615
  %v827 = vadd.f32 %v826, %v618
  %v828 = vadd.f32 %v827, %v623
  %v829 = vadd.f32 %v828, %v626
  %v830 = vadd.f32 %v829, %v631
  %v831 = vadd.f32 %v830, %v634
  %v832 = vadd.f32 %v831, %v639
  %v833 = vadd.f32 %v832, %v642
  %v834 = vadd.f32 %v833, %v647
  %v835 = vadd.f32 %v834, %v650
  %v836 = vadd.f32 %v835, %v655
  %v837 = vadd.f32 %v836, %v658
  %v838 = vadd.f32 %v837, %v663
  %v839 = vadd.f32 %v838, %v666
  %v840 = vadd.f32 %v839, %v671
  %v841 = vadd.f32 %v840, %v674
  %v842 = vadd.f32 %v841, %v679
  %v843 = vadd.f32 %v842, %v682
  %v844 = vadd.f32 %v843, %v687
  %v845 = vadd.f32 %v844, %v690
  %v846 = vadd.f32 %v845, %v695
  %v847 = vadd.f32 %v846, %v698
  %v848 = vadd.f32 %v847, %v703
  %v849 = vadd.f32 %v848, %v706
  %v850 = vadd.f32 %v849, %v711
  %v851 = vadd.f32 %v850, %v714
  %v852 = vadd.f32 %v851, %v719
  %v853 = vadd.f32 %v852, %v722
  %v854 = vadd.f32 %v853, %v727
  %v855 = vadd.f32 %v854, %v730
  %v856 = vadd.f32 %v855, %v735
  %v857 = vadd.f32 %v856, %v738
  %v858 = vadd.f32 %v857, %v743
  %v859 = vadd.f32 %v858, %v746
  %v860 = vadd.f32 %v859, %v751
  %v861 = vadd.f32 %v860, %v754
  %v862 = vadd.f32 %v861, %v759
  %v863 = vadd.f32 %v862, %v762
  %v864 = vadd.f32 %v863, %v767
  %v865 = vadd.f32 %v864, %v770
  %v866 = vadd.f32 %v865, %v775
  %v867 = vadd.f32 %v866, %v778
  %v868 = vadd.f32 %v867, %v783
  %v869 = vadd.f32 %v868, %v786
  %v870 = vadd.f32 %v869, %v791
  %v871 = vadd.f32 %v870, %v794
  %v872 = vadd.f32 %v871, %v799
  %v873 = vadd.f32 %v872, %v802
  %v874 = vadd.f32 %v873, %v807
  %v875 = vadd.f32 %v874, %v810
  %v876 = vrot.slane %v875, 4
  %v877 = vadd.f32 %v875, %v876
  %v878 = vrot.slane %v877, 2
  %v879 = vadd.f32 %v877, %v878
  %v880 = vrot.slane %v879, 1
  %v881 = vadd.f32 %v879, %v880
  %v882 = vmul.f32 %v559, %v559
  %v883 = vmul.f32 %v562, %v562
  %v884 = vmul.f32 %v567, %v567
  %v885 = vmul.f32 %v570, %v570
  %v886 = vmul.f32 %v575, %v575
  %v887 = vmul.f32 %v578, %v578
  %v888 = vmul.f32 %v583, %v583
  %v889 = vmul.f32 %v586, %v586
  %v890 = vmul.f32 %v591, %v591
  %v891 = vmul.f32 %v594, %v594
  %v892 = vmul.f32 %v599, %v599
  %v893 = vmul.f32 %v602, %v602
  %v894 = vmul.f32 %v607, %v607
  %v895 = vmul.f32 %v610, %v610
  %v896 = vmul.f32 %v615, %v615
  %v897 = vmul.f32 %v618, %v618
  %v898 = vmul.f32 %v623, %v623
  %v899 = vmul.f32 %v626, %v626
  %v900 = vmul.f32 %v631, %v631
  %v901 = vmul.f32 %v634, %v634
  %v902 = vmul.f32 %v639, %v639
  %v903 = vmul.f32 %v642, %v642
  %v904 = vmul.f32 %v647, %v647
  %v905 = vmul.f32 %v650, %v650
  %v906 = vmul.f32 %v655, %v655
  %v907 = vmul.f32 %v658, %v658
  %v908 = vmul.f32 %v663, %v663
  %v909 = vmul.f32 %v666, %v666
  %v910 = vmul.f32 %v671, %v671
  %v911 = vmul.f32 %v674, %v674
  %v912 = vmul.f32 %v679, %v679
  %v913 = vmul.f32 %v682, %v682
  %v914 = vmul.f32 %v687, %v687
  %v915 = vmul.f32 %v690, %v690
  %v916 = vmul.f32 %v695, %v695
  %v917 = vmul.f32 %v698, %v698
  %v918 = vmul.f32 %v703, %v703
  %v919 = vmul.f32 %v706, %v706
  %v920 = vmul.f32 %v711, %v711
  %v921 = vmul.f32 %v714, %v714
  %v922 = vmul.f32 %v719, %v719
  %v923 = vmul.f32 %v722, %v722
  %v924 = vmul.f32 %v727, %v727
  %v925 = vmul.f32 %v730, %v730
  %v926 = vmul.f32 %v735, %v735
  %v927 = vmul.f32 %v738, %v738
  %v928 = vmul.f32 %v743, %v743
  %v929 = vmul.f32 %v746, %v746
  %v930 = vmul.f32 %v751, %v751
  %v931 = vmul.f32 %v754, %v754
  %v932 = vmul.f32 %v759, %v759
  %v933 = vmul.f32 %v762, %v762
  %v934 = vmul.f32 %v767, %v767
  %v935 = vmul.f32 %v770, %v770
  %v936 = vmul.f32 %v775, %v775
  %v937 = vmul.f32 %v778, %v778
  %v938 = vmul.f32 %v783, %v783
  %v939 = vmul.f32 %v786, %v786
  %v940 = vmul.f32 %v791, %v791
  %v941 = vmul.f32 %v794, %v794
  %v942 = vmul.f32 %v799, %v799
  %v943 = vmul.f32 %v802, %v802
  %v944 = vmul.f32 %v807, %v807
  %v945 = vmul.f32 %v810, %v810
  %v946 = vadd.f32 %v882, %v883
  %v947 = vadd.f32 %v946, %v884
  %v948 = vadd.f32 %v947, %v885
  %v949 = vadd.f32 %v948, %v886
  %v950 = vadd.f32 %v949, %v887
  %v951 = vadd.f32 %v950, %v888
  %v952 = vadd.f32 %v951, %v889
  %v953 = vadd.f32 %v952, %v890
  %v954 = vadd.f32 %v953, %v891
  %v955 = vadd.f32 %v954, %v892
  %v956 = vadd.f32 %v955, %v893
  %v957 = vadd.f32 %v956, %v894
  %v958 = vadd.f32 %v957, %v895
  %v959 = vadd.f32 %v958, %v896
  %v960 = vadd.f32 %v959, %v897
  %v961 = vadd.f32 %v960, %v898
  %v962 = vadd.f32 %v961, %v899
  %v963 = vadd.f32 %v962, %v900
  %v964 = vadd.f32 %v963, %v901
  %v965 = vadd.f32 %v964, %v902
  %v966 = vadd.f32 %v965, %v903
  %v967 = vadd.f32 %v966, %v904
  %v968 = vadd.f32 %v967, %v905
  %v969 = vadd.f32 %v968, %v906
  %v970 = vadd.f32 %v969, %v907
  %v971 = vadd.f32 %v970, %v908
  %v972 = vadd.f32 %v971, %v909
  %v973 = vadd.f32 %v972, %v910
  %v974 = vadd.f32 %v973, %v911
  %v975 = vadd.f32 %v974, %v912
  %v976 = vadd.f32 %v975, %v913
  %v977 = vadd.f32 %v976, %v914
  %v978 = vadd.f32 %v977, %v915
  %v979 = vadd.f32 %v978, %v916
  %v980 = vadd.f32 %v979, %v917
  %v981 = vadd.f32 %v980, %v918
  %v982 = vadd.f32 %v981, %v919
  %v983 = vadd.f32 %v982, %v920
  %v984 = vadd.f32 %v983, %v921
  %v985 = vadd.f32 %v984, %v922
  %v986 = vadd.f32 %v985, %v923
  %v987 = vadd.f32 %v986, %v924
  %v988 = vadd.f32 %v987, %v925
  %v989 = vadd.f32 %v988, %v926
  %v990 = vadd.f32 %v989, %v927
  %v991 = vadd.f32 %v990, %v928
  %v992 = vadd.f32 %v991, %v929
  %v993 = vadd.f32 %v992, %v930
  %v994 = vadd.f32 %v993, %v931
  %v995 = vadd.f32 %v994, %v932
  %v996 = vadd.f32 %v995, %v933
  %v997 = vadd.f32 %v996, %v934
  %v998 = vadd.f32 %v997, %v935
  %v999 = vadd.f32 %v998, %v936
  %v1000 = vadd.f32 %v999, %v937
  %v1001 = vadd.f32 %v1000, %v938
  %v1002 = vadd.f32 %v1001, %v939
  %v1003 = vadd.f32 %v1002, %v940
  %v1004 = vadd.f32 %v1003, %v941
  %v1005 = vadd.f32 %v1004, %v942
  %v1006 = vadd.f32 %v1005, %v943
  %v1007 = vadd.f32 %v1006, %v944
  %v1008 = vadd.f32 %v1007, %v945
  %v1009 = vrot.slane %v1008, 4
  %v1010 = vadd.f32 %v1008, %v1009
  %v1011 = vrot.slane %v1010, 2
  %v1012 = vadd.f32 %v1010, %v1011
  %v1013 = vrot.slane %v1012, 1
  %v1014 = vadd.f32 %v1012, %v1013
  %vm1015 = vcmask 1040384
  %v1016 = vsel %vm1015, %v881, %v1014
  %1017 = vst [vmem:[%s2] sm:$0x3] %v1016
  // Predicated region
  $region10: #{up_forward.2} parent=0 // pred_check
    _
  $region11: #{up_forward.2} parent=0 // pred_check_branch
    %1019 = sbr.rel (0) target = $region13
  $region12: #{up_forward.2} parent=0 // pred_region
    _
  $region13: #{up_forward.2} parent=0 // pred_fallthru
    _
  // Predicated region
  $region14: #{up_forward.2} parent=0 // pred_check
    _
  $region15: #{up_forward.2} parent=0 // pred_check_branch
    %1021 = sbr.rel (0) target = $region17
  $region16: #{up_forward.2} parent=0 // pred_region
    _
  $region17: #{up_forward.2} parent=0 // pred_fallthru
    _

// kernel: up_forward.3
$region0: #{up_forward.3}
  #allocation0 [shape = 'u32[]', space=smem, size = 0x4, offset = 0x4, fixed_abs, tag = 'smem constant byte address 0x4 - core index']
  #allocation1 [shape = 'u32[144,128]{1,0:T(1,128)}', space=vmem, size = 0x12000, scoped, tag = 'internal scratch']
  %s0 = inlined_call_operand.vmem [shape: bf16[512,256], index: 0, kind: input, shape index: {}]
  %s1 = inlined_call_operand.vmem [shape: bf16[256,128], index: 1, kind: input, shape index: {}]
  %s2 = inlined_call_operand.vmem [shape: f32[1,128], index: 2, kind: input, shape index: {}]
  %s3 = inlined_call_operand.vmem [shape: f32[1,128], index: 3, kind: input, shape index: {}]
  %s4 = inlined_call_operand.vmem [shape: f32[512,128], index: 4, kind: output, shape index: {}]
  %s5 = sld [smem:[#allocation0]]
  $region26: #{up_forward.3} parent=0
    _
  %s7 = ssub.s32 1, %s5
  %s8 = scalar_select 0, %s7, %s5
  // Predicated region
  $region2: #{up_forward.3} parent=0 // pred_check
    _
  $region3: #{up_forward.3} parent=0 // pred_check_branch
    %10 = sbr.rel (0) target = $region5
  $region4: #{up_forward.3} parent=0 // pred_region
    _
  $region5: #{up_forward.3} parent=0 // pred_fallthru
    _
  // Predicated region
  $region6: #{up_forward.3} parent=0 // pred_check
    _
  $region7: #{up_forward.3} parent=0 // pred_check_branch
    %12 = sbr.rel (0) target = $region9
  $region8: #{up_forward.3} parent=0 // pred_region
    _
  $region9: #{up_forward.3} parent=0 // pred_fallthru
    _
  // Predicated region
  $region10: #{up_forward.3} parent=0 // pred_check
    _
  $region11: #{up_forward.3} parent=0 // pred_check_branch
    %14 = sbr.rel (0) target = $region13
  $region12: #{up_forward.3} parent=0 // pred_region
    _
  $region13: #{up_forward.3} parent=0 // pred_fallthru
    _
  // Predicated region
  $region14: #{up_forward.3} parent=0 // pred_check
    _
  $region15: #{up_forward.3} parent=0 // pred_check_branch
    %16 = sbr.rel (0) target = $region17
  $region16: #{up_forward.3} parent=0 // pred_region
    _
  $region17: #{up_forward.3} parent=0 // pred_fallthru
    _
  %v18 = vld [vmem:[%s0] sm:$0xff]
  %v19 = vld [vmem:[%s0 + $0x8] sm:$0xff]
  %v20 = vld [vmem:[%s0 + $0x10] sm:$0xff]
  %v21 = vld [vmem:[%s0 + $0x18] sm:$0xff]
  %v22 = vld [vmem:[%s0 + $0x20] sm:$0xff]
  %v23 = vld [vmem:[%s0 + $0x28] sm:$0xff]
  %v24 = vld [vmem:[%s0 + $0x30] sm:$0xff]
  %v25 = vld [vmem:[%s0 + $0x38] sm:$0xff]
  %v26 = vld [vmem:[%s0 + $0x40] sm:$0xff]
  %v27 = vld [vmem:[%s0 + $0x48] sm:$0xff]
  %v28 = vld [vmem:[%s0 + $0x50] sm:$0xff]
  %v29 = vld [vmem:[%s0 + $0x58] sm:$0xff]
  %v30 = vld [vmem:[%s0 + $0x60] sm:$0xff]
  %v31 = vld [vmem:[%s0 + $0x68] sm:$0xff]
  %v32 = vld [vmem:[%s0 + $0x70] sm:$0xff]
  %v33 = vld [vmem:[%s0 + $0x78] sm:$0xff]
  %v34 = vld [vmem:[%s0 + $0x80] sm:$0xff]
  %v35 = vld [vmem:[%s0 + $0x88] sm:$0xff]
  %v36 = vld [vmem:[%s0 + $0x90] sm:$0xff]
  %v37 = vld [vmem:[%s0 + $0x98] sm:$0xff]
  %v38 = vld [vmem:[%s0 + $0xa0] sm:$0xff]
  %v39 = vld [vmem:[%s0 + $0xa8] sm:$0xff]
  %v40 = vld [vmem:[%s0 + $0xb0] sm:$0xff]
  %v41 = vld [vmem:[%s0 + $0xb8] sm:$0xff]
  %v42 = vld [vmem:[%s0 + $0xc0] sm:$0xff]
  %v43 = vld [vmem:[%s0 + $0xc8] sm:$0xff]
  %v44 = vld [vmem:[%s0 + $0xd0] sm:$0xff]
  %v45 = vld [vmem:[%s0 + $0xd8] sm:$0xff]
  %v46 = vld [vmem:[%s0 + $0xe0] sm:$0xff]
  %v47 = vld [vmem:[%s0 + $0xe8] sm:$0xff]
  %v48 = vld [vmem:[%s0 + $0xf0] sm:$0xff]
  %v49 = vld [vmem:[%s0 + $0xf8] sm:$0xff]
  %v50 = vld [vmem:[%s0 + $0x100] sm:$0xff]
  %v51 = vld [vmem:[%s0 + $0x108] sm:$0xff]
  %v52 = vld [vmem:[%s0 + $0x110] sm:$0xff]
  %v53 = vld [vmem:[%s0 + $0x118] sm:$0xff]
  %v54 = vld [vmem:[%s0 + $0x120] sm:$0xff]
  %v55 = vld [vmem:[%s0 + $0x128] sm:$0xff]
  %v56 = vld [vmem:[%s0 + $0x130] sm:$0xff]
  %v57 = vld [vmem:[%s0 + $0x138] sm:$0xff]
  %v58 = vld [vmem:[%s0 + $0x140] sm:$0xff]
  %v59 = vld [vmem:[%s0 + $0x148] sm:$0xff]
  %v60 = vld [vmem:[%s0 + $0x150] sm:$0xff]
  %v61 = vld [vmem:[%s0 + $0x158] sm:$0xff]
  %v62 = vld [vmem:[%s0 + $0x160] sm:$0xff]
  %v63 = vld [vmem:[%s0 + $0x168] sm:$0xff]
  %v64 = vld [vmem:[%s0 + $0x170] sm:$0xff]
  %v65 = vld [vmem:[%s0 + $0x178] sm:$0xff]
  %v66 = vld [vmem:[%s0 + $0x180] sm:$0xff]
  %v67 = vld [vmem:[%s0 + $0x188] sm:$0xff]
  %v68 = vld [vmem:[%s0 + $0x190] sm:$0xff]
  %v69 = vld [vmem:[%s0 + $0x198] sm:$0xff]
  %v70 = vld [vmem:[%s0 + $0x1a0] sm:$0xff]
  %v71 = vld [vmem:[%s0 + $0x1a8] sm:$0xff]
  %v72 = vld [vmem:[%s0 + $0x1b0] sm:$0xff]
  %v73 = vld [vmem:[%s0 + $0x1b8] sm:$0xff]
  %v74 = vld [vmem:[%s0 + $0x1c0] sm:$0xff]
  %v75 = vld [vmem:[%s0 + $0x1c8] sm:$0xff]
  %v76 = vld [vmem:[%s0 + $0x1d0] sm:$0xff]
  %v77 = vld [vmem:[%s0 + $0x1d8] sm:$0xff]
  %v78 = vld [vmem:[%s0 + $0x1e0] sm:$0xff]
  %v79 = vld [vmem:[%s0 + $0x1e8] sm:$0xff]
  %v80 = vld [vmem:[%s0 + $0x1f0] sm:$0xff]
  %v81 = vld [vmem:[%s0 + $0x1f8] sm:$0xff]
  %v82 = vld [vmem:[%s1] sm:$0xf]
  %v83 = vld [vmem:[%s1 + $0x4] sm:$0xf]
  %v84 = vld [vmem:[%s1 + $0x8] sm:$0xf]
  %v85 = vld [vmem:[%s1 + $0xc] sm:$0xf]
  %v86 = vld [vmem:[%s1 + $0x10] sm:$0xf]
  %v87 = vld [vmem:[%s1 + $0x14] sm:$0xf]
  %v88 = vld [vmem:[%s1 + $0x18] sm:$0xf]
  %v89 = vld [vmem:[%s1 + $0x1c] sm:$0xf]
  %v90 = vld [vmem:[%s1 + $0x20] sm:$0xf]
  %v91 = vld [vmem:[%s1 + $0x24] sm:$0xf]
  %v92 = vld [vmem:[%s1 + $0x28] sm:$0xf]
  %v93 = vld [vmem:[%s1 + $0x2c] sm:$0xf]
  %v94 = vld [vmem:[%s1 + $0x30] sm:$0xf]
  %v95 = vld [vmem:[%s1 + $0x34] sm:$0xf]
  %v96 = vld [vmem:[%s1 + $0x38] sm:$0xf]
  %v97 = vld [vmem:[%s1 + $0x3c] sm:$0xf]
  %v98 = vld [vmem:[%s1 + $0x40] sm:$0xf]
  %v99 = vld [vmem:[%s1 + $0x44] sm:$0xf]
  %v100 = vld [vmem:[%s1 + $0x48] sm:$0xf]
  %v101 = vld [vmem:[%s1 + $0x4c] sm:$0xf]
  %v102 = vld [vmem:[%s1 + $0x50] sm:$0xf]
  %v103 = vld [vmem:[%s1 + $0x54] sm:$0xf]
  %v104 = vld [vmem:[%s1 + $0x58] sm:$0xf]
  %v105 = vld [vmem:[%s1 + $0x5c] sm:$0xf]
  %v106 = vld [vmem:[%s1 + $0x60] sm:$0xf]
  %v107 = vld [vmem:[%s1 + $0x64] sm:$0xf]
  %v108 = vld [vmem:[%s1 + $0x68] sm:$0xf]
  %v109 = vld [vmem:[%s1 + $0x6c] sm:$0xf]
  %v110 = vld [vmem:[%s1 + $0x70] sm:$0xf]
  %v111 = vld [vmem:[%s1 + $0x74] sm:$0xf]
  %v112 = vld [vmem:[%s1 + $0x78] sm:$0xf]
  %v113 = vld [vmem:[%s1 + $0x7c] sm:$0xf]
  %v178 = vunpack.c.l.b16 %v18
  %v179 = vunpack.c.h.b16 %v18
  %v180 = vunpack.c.l.b16 %v19
  %v181 = vunpack.c.h.b16 %v19
  %v182 = vunpack.c.l.b16 %v20
  %v183 = vunpack.c.h.b16 %v20
  %v184 = vunpack.c.l.b16 %v21
  %v185 = vunpack.c.h.b16 %v21
  %v186 = vunpack.c.l.b16 %v22
  %v187 = vunpack.c.h.b16 %v22
  %v188 = vunpack.c.l.b16 %v23
  %v189 = vunpack.c.h.b16 %v23
  %v190 = vunpack.c.l.b16 %v24
  %v191 = vunpack.c.h.b16 %v24
  %v192 = vunpack.c.l.b16 %v25
  %v193 = vunpack.c.h.b16 %v25
  %v194 = vunpack.c.l.b16 %v26
  %v195 = vunpack.c.h.b16 %v26
  %v196 = vunpack.c.l.b16 %v27
  %v197 = vunpack.c.h.b16 %v27
  %v198 = vunpack.c.l.b16 %v28
  %v199 = vunpack.c.h.b16 %v28
  %v200 = vunpack.c.l.b16 %v29
  %v201 = vunpack.c.h.b16 %v29
  %v202 = vunpack.c.l.b16 %v30
  %v203 = vunpack.c.h.b16 %v30
  %v204 = vunpack.c.l.b16 %v31
  %v205 = vunpack.c.h.b16 %v31
  %v206 = vunpack.c.l.b16 %v32
  %v207 = vunpack.c.h.b16 %v32
  %v208 = vunpack.c.l.b16 %v33
  %v209 = vunpack.c.h.b16 %v33
  %v210 = vunpack.c.l.b16 %v34
  %v211 = vunpack.c.h.b16 %v34
  %v212 = vunpack.c.l.b16 %v35
  %v213 = vunpack.c.h.b16 %v35
  %v214 = vunpack.c.l.b16 %v36
  %v215 = vunpack.c.h.b16 %v36
  %v216 = vunpack.c.l.b16 %v37
  %v217 = vunpack.c.h.b16 %v37
  %v218 = vunpack.c.l.b16 %v38
  %v219 = vunpack.c.h.b16 %v38
  %v220 = vunpack.c.l.b16 %v39
  %v221 = vunpack.c.h.b16 %v39
  %v222 = vunpack.c.l.b16 %v40
  %v223 = vunpack.c.h.b16 %v40
  %v224 = vunpack.c.l.b16 %v41
  %v225 = vunpack.c.h.b16 %v41
  %v226 = vunpack.c.l.b16 %v42
  %v227 = vunpack.c.h.b16 %v42
  %v228 = vunpack.c.l.b16 %v43
  %v229 = vunpack.c.h.b16 %v43
  %v230 = vunpack.c.l.b16 %v44
  %v231 = vunpack.c.h.b16 %v44
  %v232 = vunpack.c.l.b16 %v45
  %v233 = vunpack.c.h.b16 %v45
  %v234 = vunpack.c.l.b16 %v46
  %v235 = vunpack.c.h.b16 %v46
  %v236 = vunpack.c.l.b16 %v47
  %v237 = vunpack.c.h.b16 %v47
  %v238 = vunpack.c.l.b16 %v48
  %v239 = vunpack.c.h.b16 %v48
  %v240 = vunpack.c.l.b16 %v49
  %v241 = vunpack.c.h.b16 %v49
  %v242 = vunpack.c.l.b16 %v50
  %v243 = vunpack.c.h.b16 %v50
  %v244 = vunpack.c.l.b16 %v51
  %v245 = vunpack.c.h.b16 %v51
  %v246 = vunpack.c.l.b16 %v52
  %v247 = vunpack.c.h.b16 %v52
  %v248 = vunpack.c.l.b16 %v53
  %v249 = vunpack.c.h.b16 %v53
  %v250 = vunpack.c.l.b16 %v54
  %v251 = vunpack.c.h.b16 %v54
  %v252 = vunpack.c.l.b16 %v55
  %v253 = vunpack.c.h.b16 %v55
  %v254 = vunpack.c.l.b16 %v56
  %v255 = vunpack.c.h.b16 %v56
  %v256 = vunpack.c.l.b16 %v57
  %v257 = vunpack.c.h.b16 %v57
  %v258 = vunpack.c.l.b16 %v58
  %v259 = vunpack.c.h.b16 %v58
  %v260 = vunpack.c.l.b16 %v59
  %v261 = vunpack.c.h.b16 %v59
  %v262 = vunpack.c.l.b16 %v60
  %v263 = vunpack.c.h.b16 %v60
  %v264 = vunpack.c.l.b16 %v61
  %v265 = vunpack.c.h.b16 %v61
  %v266 = vunpack.c.l.b16 %v62
  %v267 = vunpack.c.h.b16 %v62
  %v268 = vunpack.c.l.b16 %v63
  %v269 = vunpack.c.h.b16 %v63
  %v270 = vunpack.c.l.b16 %v64
  %v271 = vunpack.c.h.b16 %v64
  %v272 = vunpack.c.l.b16 %v65
  %v273 = vunpack.c.h.b16 %v65
  %v274 = vunpack.c.l.b16 %v66
  %v275 = vunpack.c.h.b16 %v66
  %v276 = vunpack.c.l.b16 %v67
  %v277 = vunpack.c.h.b16 %v67
  %v278 = vunpack.c.l.b16 %v68
  %v279 = vunpack.c.h.b16 %v68
  %v280 = vunpack.c.l.b16 %v69
  %v281 = vunpack.c.h.b16 %v69
  %v282 = vunpack.c.l.b16 %v70
  %v283 = vunpack.c.h.b16 %v70
  %v284 = vunpack.c.l.b16 %v71
  %v285 = vunpack.c.h.b16 %v71
  %v286 = vunpack.c.l.b16 %v72
  %v287 = vunpack.c.h.b16 %v72
  %v288 = vunpack.c.l.b16 %v73
  %v289 = vunpack.c.h.b16 %v73
  %v290 = vunpack.c.l.b16 %v74
  %v291 = vunpack.c.h.b16 %v74
  %v292 = vunpack.c.l.b16 %v75
  %v293 = vunpack.c.h.b16 %v75
  %v294 = vunpack.c.l.b16 %v76
  %v295 = vunpack.c.h.b16 %v76
  %v296 = vunpack.c.l.b16 %v77
  %v297 = vunpack.c.h.b16 %v77
  %v298 = vunpack.c.l.b16 %v78
  %v299 = vunpack.c.h.b16 %v78
  %v300 = vunpack.c.l.b16 %v79
  %v301 = vunpack.c.h.b16 %v79
  %v302 = vunpack.c.l.b16 %v80
  %v303 = vunpack.c.h.b16 %v80
  %v304 = vunpack.c.l.b16 %v81
  %v305 = vunpack.c.h.b16 %v81
  %v306 = vpack.c.b16 %v180, %v178
  %v307 = vpack.c.b16 %v181, %v179
  %v308 = vpack.c.b16 %v184, %v182
  %v309 = vpack.c.b16 %v185, %v183
  %v310 = vpack.c.b16 %v188, %v186
  %v311 = vpack.c.b16 %v189, %v187
  %v312 = vpack.c.b16 %v192, %v190
  %v313 = vpack.c.b16 %v193, %v191
  %v314 = vpack.c.b16 %v196, %v194
  %v315 = vpack.c.b16 %v197, %v195
  %v316 = vpack.c.b16 %v200, %v198
  %v317 = vpack.c.b16 %v201, %v199
  %v318 = vpack.c.b16 %v204, %v202
  %v319 = vpack.c.b16 %v205, %v203
  %v320 = vpack.c.b16 %v208, %v206
  %v321 = vpack.c.b16 %v209, %v207
  %v322 = vpack.c.b16 %v212, %v210
  %v323 = vpack.c.b16 %v213, %v211
  %v324 = vpack.c.b16 %v216, %v214
  %v325 = vpack.c.b16 %v217, %v215
  %v326 = vpack.c.b16 %v220, %v218
  %v327 = vpack.c.b16 %v221, %v219
  %v328 = vpack.c.b16 %v224, %v222
  %v329 = vpack.c.b16 %v225, %v223
  %v330 = vpack.c.b16 %v228, %v226
  %v331 = vpack.c.b16 %v229, %v227
  %v332 = vpack.c.b16 %v232, %v230
  %v333 = vpack.c.b16 %v233, %v231
  %v334 = vpack.c.b16 %v236, %v234
  %v335 = vpack.c.b16 %v237, %v235
  %v336 = vpack.c.b16 %v240, %v238
  %v337 = vpack.c.b16 %v241, %v239
  %v338 = vpack.c.b16 %v244, %v242
  %v339 = vpack.c.b16 %v245, %v243
  %v340 = vpack.c.b16 %v248, %v246
  %v341 = vpack.c.b16 %v249, %v247
  %v342 = vpack.c.b16 %v252, %v250
  %v343 = vpack.c.b16 %v253, %v251
  %v344 = vpack.c.b16 %v256, %v254
  %v345 = vpack.c.b16 %v257, %v255
  %v346 = vpack.c.b16 %v260, %v258
  %v347 = vpack.c.b16 %v261, %v259
  %v348 = vpack.c.b16 %v264, %v262
  %v349 = vpack.c.b16 %v265, %v263
  %v350 = vpack.c.b16 %v268, %v266
  %v351 = vpack.c.b16 %v269, %v267
  %v352 = vpack.c.b16 %v272, %v270
  %v353 = vpack.c.b16 %v273, %v271
  %v354 = vpack.c.b16 %v276, %v274
  %v355 = vpack.c.b16 %v277, %v275
  %v356 = vpack.c.b16 %v280, %v278
  %v357 = vpack.c.b16 %v281, %v279
  %v358 = vpack.c.b16 %v284, %v282
  %v359 = vpack.c.b16 %v285, %v283
  %v360 = vpack.c.b16 %v288, %v286
  %v361 = vpack.c.b16 %v289, %v287
  %v362 = vpack.c.b16 %v292, %v290
  %v363 = vpack.c.b16 %v293, %v291
  %v364 = vpack.c.b16 %v296, %v294
  %v365 = vpack.c.b16 %v297, %v295
  %v366 = vpack.c.b16 %v300, %v298
  %v367 = vpack.c.b16 %v301, %v299
  %v368 = vpack.c.b16 %v304, %v302
  %v369 = vpack.c.b16 %v305, %v303
  %v466 = vunpack.c.l.b16 %v82
  %v467 = vunpack.c.l.b16 %v83
  %v468 = vunpack.c.l.b16 %v84
  %v469 = vunpack.c.l.b16 %v85
  %v470 = vunpack.c.l.b16 %v86
  %v471 = vunpack.c.l.b16 %v87
  %v472 = vunpack.c.l.b16 %v88
  %v473 = vunpack.c.l.b16 %v89
  %v474 = vunpack.c.l.b16 %v90
  %v475 = vunpack.c.l.b16 %v91
  %v476 = vunpack.c.l.b16 %v92
  %v477 = vunpack.c.l.b16 %v93
  %v478 = vunpack.c.l.b16 %v94
  %v479 = vunpack.c.l.b16 %v95
  %v480 = vunpack.c.l.b16 %v96
  %v481 = vunpack.c.l.b16 %v97
  %v482 = vunpack.c.l.b16 %v98
  %v483 = vunpack.c.l.b16 %v99
  %v484 = vunpack.c.l.b16 %v100
  %v485 = vunpack.c.l.b16 %v101
  %v486 = vunpack.c.l.b16 %v102
  %v487 = vunpack.c.l.b16 %v103
  %v488 = vunpack.c.l.b16 %v104
  %v489 = vunpack.c.l.b16 %v105
  %v490 = vunpack.c.l.b16 %v106
  %v491 = vunpack.c.l.b16 %v107
  %v492 = vunpack.c.l.b16 %v108
  %v493 = vunpack.c.l.b16 %v109
  %v494 = vunpack.c.l.b16 %v110
  %v495 = vunpack.c.l.b16 %v111
  %v496 = vunpack.c.l.b16 %v112
  %v497 = vunpack.c.l.b16 %v113
  %v498 = vpack.c.b16 %v467, %v466
  %v499 = vpack.c.b16 %v469, %v468
  %v500 = vpack.c.b16 %v471, %v470
  %v501 = vpack.c.b16 %v473, %v472
  %v502 = vpack.c.b16 %v475, %v474
  %v503 = vpack.c.b16 %v477, %v476
  %v504 = vpack.c.b16 %v479, %v478
  %v505 = vpack.c.b16 %v481, %v480
  %v506 = vpack.c.b16 %v483, %v482
  %v507 = vpack.c.b16 %v485, %v484
  %v508 = vpack.c.b16 %v487, %v486
  %v509 = vpack.c.b16 %v489, %v488
  %v510 = vpack.c.b16 %v491, %v490
  %v511 = vpack.c.b16 %v493, %v492
  %v512 = vpack.c.b16 %v495, %v494
  %v513 = vpack.c.b16 %v497, %v496
  %530 = vmatprep.subr.bf16.mxu0 0
  %531 = vmatpush1.bf16.msra.mxu0 %v498
  %532 = vmatprep.subr.bf16.mxu0 0
  %533 = vmatpush1.bf16.msra.mxu0 %v499
  %534 = vmatprep.subr.bf16.mxu0 0
  %535 = vmatpush1.bf16.msra.mxu0 %v500
  %536 = vmatprep.subr.bf16.mxu0 0
  %537 = vmatpush1.bf16.msra.mxu0 %v501
  %538 = vmatprep.subr.bf16.mxu0 0
  %539 = vmatpush1.bf16.msra.mxu0 %v502
  %540 = vmatprep.subr.bf16.mxu0 0
  %541 = vmatpush1.bf16.msra.mxu0 %v503
  %542 = vmatprep.subr.bf16.mxu0 0
  %543 = vmatpush1.bf16.msra.mxu0 %v504
  %544 = vmatprep.subr.bf16.mxu0 0
  %545 = vmatpush1.bf16.msra.mxu0 %v505
  %546 = vmatprep.subr.bf16.mxu0 0
  %547 = vmatpush1.bf16.msra.mxu0 %v506
  %548 = vmatprep.subr.bf16.mxu0 0
  %549 = vmatpush1.bf16.msra.mxu0 %v507
  %550 = vmatprep.subr.bf16.mxu0 0
  %551 = vmatpush1.bf16.msra.mxu0 %v508
  %552 = vmatprep.subr.bf16.mxu0 0
  %553 = vmatpush1.bf16.msra.mxu0 %v509
  %554 = vmatprep.subr.bf16.mxu0 0
  %555 = vmatpush1.bf16.msra.mxu0 %v510
  %556 = vmatprep.subr.bf16.mxu0 0
  %557 = vmatpush1.bf16.msra.mxu0 %v511
  %558 = vmatprep.subr.bf16.mxu0 0
  %559 = vmatpush1.bf16.msra.mxu0 %v512
  %560 = vmatprep.subr.bf16.mxu0 0
  %561 = vmatpush1.bf16.msra.mxu0 %v513
  %562 = vmatprep.mubr.bf16.mxu0 %v307
  %563 = vmatmul.mubr.bf16.gmra.mrb[0].mxu0 %v306
  %v564 = vpop.f32.mrb[0].mxu0
  %v565 = vadd.f32 0.0, %v564
  %v566 = vpop.f32.mrb[0].mxu0
  %v567 = vpop.f32.mrb[0].mxu0
  %v568 = vadd.f32 0.0, %v567
  %v569 = vpop.f32.mrb[0].mxu0
  %570 = vmatprep.mubr.bf16.mxu0 %v309
  %571 = vmatmul.mubr.bf16.gmra.mrb[0].mxu0 %v308
  %v572 = vpop.f32.mrb[0].mxu0
  %v573 = vadd.f32 0.0, %v572
  %v574 = vpop.f32.mrb[0].mxu0
  %v575 = vpop.f32.mrb[0].mxu0
  %v576 = vadd.f32 0.0, %v575
  %v577 = vpop.f32.mrb[0].mxu0
  %578 = vmatprep.mubr.bf16.mxu0 %v311
  %579 = vmatmul.mubr.bf16.gmra.mrb[0].mxu0 %v310
  %v580 = vpop.f32.mrb[0].mxu0
  %v581 = vadd.f32 0.0, %v580
  %v582 = vpop.f32.mrb[0].mxu0
  %v583 = vpop.f32.mrb[0].mxu0
  %v584 = vadd.f32 0.0, %v583
  %v585 = vpop.f32.mrb[0].mxu0
  %586 = vmatprep.mubr.bf16.mxu0 %v313
  %587 = vmatmul.mubr.bf16.gmra.mrb[0].mxu0 %v312
  %v588 = vpop.f32.mrb[0].mxu0
  %v589 = vadd.f32 0.0, %v588
  %v590 = vpop.f32.mrb[0].mxu0
  %v591 = vpop.f32.mrb[0].mxu0
  %v592 = vadd.f32 0.0, %v591
  %v593 = vpop.f32.mrb[0].mxu0
  %594 = vmatprep.mubr.bf16.mxu0 %v315
  %595 = vmatmul.mubr.bf16.gmra.mrb[0].mxu0 %v314
  %v596 = vpop.f32.mrb[0].mxu0
  %v597 = vadd.f32 0.0, %v596
  %v598 = vpop.f32.mrb[0].mxu0
  %v599 = vpop.f32.mrb[0].mxu0
  %v600 = vadd.f32 0.0, %v599
  %v601 = vpop.f32.mrb[0].mxu0
  %602 = vmatprep.mubr.bf16.mxu0 %v317
  %603 = vmatmul.mubr.bf16.gmra.mrb[0].mxu0 %v316
  %v604 = vpop.f32.mrb[0].mxu0
  %v605 = vadd.f32 0.0, %v604
  %v606 = vpop.f32.mrb[0].mxu0
  %v607 = vpop.f32.mrb[0].mxu0
  %v608 = vadd.f32 0.0, %v607
  %v609 = vpop.f32.mrb[0].mxu0
  %610 = vmatprep.mubr.bf16.mxu0 %v319
  %611 = vmatmul.mubr.bf16.gmra.mrb[0].mxu0 %v318
  %v612 = vpop.f32.mrb[0].mxu0
  %v613 = vadd.f32 0.0, %v612
  %v614 = vpop.f32.mrb[0].mxu0
  %v615 = vpop.f32.mrb[0].mxu0
  %v616 = vadd.f32 0.0, %v615
  %v617 = vpop.f32.mrb[0].mxu0
  %618 = vmatprep.mubr.bf16.mxu0 %v321
  %619 = vmatmul.mubr.bf16.gmra.mrb[0].mxu0 %v320
  %v620 = vpop.f32.mrb[0].mxu0
  %v621 = vadd.f32 0.0, %v620
  %v622 = vpop.f32.mrb[0].mxu0
  %v623 = vpop.f32.mrb[0].mxu0
  %v624 = vadd.f32 0.0, %v623
  %v625 = vpop.f32.mrb[0].mxu0
  %626 = vmatprep.mubr.bf16.mxu0 %v323
  %627 = vmatmul.mubr.bf16.gmra.mrb[0].mxu0 %v322
  %v628 = vpop.f32.mrb[0].mxu0
  %v629 = vadd.f32 0.0, %v628
  %v630 = vpop.f32.mrb[0].mxu0
  %v631 = vpop.f32.mrb[0].mxu0
  %v632 = vadd.f32 0.0, %v631
  %v633 = vpop.f32.mrb[0].mxu0
  %634 = vmatprep.mubr.bf16.mxu0 %v325
  %635 = vmatmul.mubr.bf16.gmra.mrb[0].mxu0 %v324
  %v636 = vpop.f32.mrb[0].mxu0
  %v637 = vadd.f32 0.0, %v636
  %v638 = vpop.f32.mrb[0].mxu0
  %v639 = vpop.f32.mrb[0].mxu0
  %v640 = vadd.f32 0.0, %v639
  %v641 = vpop.f32.mrb[0].mxu0
  %642 = vmatprep.mubr.bf16.mxu0 %v327
  %643 = vmatmul.mubr.bf16.gmra.mrb[0].mxu0 %v326
  %v644 = vpop.f32.mrb[0].mxu0
  %v645 = vadd.f32 0.0, %v644
  %v646 = vpop.f32.mrb[0].mxu0
  %v647 = vpop.f32.mrb[0].mxu0
  %v648 = vadd.f32 0.0, %v647
  %v649 = vpop.f32.mrb[0].mxu0
  %650 = vmatprep.mubr.bf16.mxu0 %v329
  %651 = vmatmul.mubr.bf16.gmra.mrb[0].mxu0 %v328
  %v652 = vpop.f32.mrb[0].mxu0
  %v653 = vadd.f32 0.0, %v652
  %v654 = vpop.f32.mrb[0].mxu0
  %v655 = vpop.f32.mrb[0].mxu0
  %v656 = vadd.f32 0.0, %v655
  %v657 = vpop.f32.mrb[0].mxu0
  %658 = vmatprep.mubr.bf16.mxu0 %v331
  %659 = vmatmul.mubr.bf16.gmra.mrb[0].mxu0 %v330
  %v660 = vpop.f32.mrb[0].mxu0
  %v661 = vadd.f32 0.0, %v660
  %v662 = vpop.f32.mrb[0].mxu0
  %v663 = vpop.f32.mrb[0].mxu0
  %v664 = vadd.f32 0.0, %v663
  %v665 = vpop.f32.mrb[0].mxu0
  %666 = vmatprep.mubr.bf16.mxu0 %v333
  %667 = vmatmul.mubr.bf16.gmra.mrb[0].mxu0 %v332
  %v668 = vpop.f32.mrb[0].mxu0
  %v669 = vadd.f32 0.0, %v668
  %v670 = vpop.f32.mrb[0].mxu0
  %v671 = vpop.f32.mrb[0].mxu0
  %v672 = vadd.f32 0.0, %v671
  %v673 = vpop.f32.mrb[0].mxu0
  %674 = vmatprep.mubr.bf16.mxu0 %v335
  %675 = vmatmul.mubr.bf16.gmra.mrb[0].mxu0 %v334
  %v676 = vpop.f32.mrb[0].mxu0
  %v677 = vadd.f32 0.0, %v676
  %v678 = vpop.f32.mrb[0].mxu0
  %v679 = vpop.f32.mrb[0].mxu0
  %v680 = vadd.f32 0.0, %v679
  %v681 = vpop.f32.mrb[0].mxu0
  %682 = vmatprep.mubr.bf16.mxu0 %v337
  %683 = vmatmul.mubr.bf16.gmra.mrb[0].mxu0 %v336
  %v684 = vpop.f32.mrb[0].mxu0
  %v685 = vadd.f32 0.0, %v684
  %v686 = vpop.f32.mrb[0].mxu0
  %v687 = vpop.f32.mrb[0].mxu0
  %v688 = vadd.f32 0.0, %v687
  %v689 = vpop.f32.mrb[0].mxu0
  %690 = vmatprep.mubr.bf16.mxu0 %v339
  %691 = vmatmul.mubr.bf16.gmra.mrb[0].mxu0 %v338
  %v692 = vpop.f32.mrb[0].mxu0
  %v693 = vadd.f32 0.0, %v692
  %v694 = vpop.f32.mrb[0].mxu0
  %v695 = vpop.f32.mrb[0].mxu0
  %v696 = vadd.f32 0.0, %v695
  %v697 = vpop.f32.mrb[0].mxu0
  %698 = vmatprep.mubr.bf16.mxu0 %v341
  %699 = vmatmul.mubr.bf16.gmra.mrb[0].mxu0 %v340
  %v700 = vpop.f32.mrb[0].mxu0
  %v701 = vadd.f32 0.0, %v700
  %v702 = vpop.f32.mrb[0].mxu0
  %v703 = vpop.f32.mrb[0].mxu0
  %v704 = vadd.f32 0.0, %v703
  %v705 = vpop.f32.mrb[0].mxu0
  %706 = vmatprep.mubr.bf16.mxu0 %v343
  %707 = vmatmul.mubr.bf16.gmra.mrb[0].mxu0 %v342
  %v708 = vpop.f32.mrb[0].mxu0
  %v709 = vadd.f32 0.0, %v708
  %v710 = vpop.f32.mrb[0].mxu0
  %v711 = vpop.f32.mrb[0].mxu0
  %v712 = vadd.f32 0.0, %v711
  %v713 = vpop.f32.mrb[0].mxu0
  %714 = vmatprep.mubr.bf16.mxu0 %v345
  %715 = vmatmul.mubr.bf16.gmra.mrb[0].mxu0 %v344
  %v716 = vpop.f32.mrb[0].mxu0
  %v717 = vadd.f32 0.0, %v716
  %v718 = vpop.f32.mrb[0].mxu0
  %v719 = vpop.f32.mrb[0].mxu0
  %v720 = vadd.f32 0.0, %v719
  %v721 = vpop.f32.mrb[0].mxu0
  %722 = vmatprep.mubr.bf16.mxu0 %v347
  %723 = vmatmul.mubr.bf16.gmra.mrb[0].mxu0 %v346
  %v724 = vpop.f32.mrb[0].mxu0
  %v725 = vadd.f32 0.0, %v724
  %v726 = vpop.f32.mrb[0].mxu0
  %v727 = vpop.f32.mrb[0].mxu0
  %v728 = vadd.f32 0.0, %v727
  %v729 = vpop.f32.mrb[0].mxu0
  %730 = vmatprep.mubr.bf16.mxu0 %v349
  %731 = vmatmul.mubr.bf16.gmra.mrb[0].mxu0 %v348
  %v732 = vpop.f32.mrb[0].mxu0
  %v733 = vadd.f32 0.0, %v732
  %v734 = vpop.f32.mrb[0].mxu0
  %v735 = vpop.f32.mrb[0].mxu0
  %v736 = vadd.f32 0.0, %v735
  %v737 = vpop.f32.mrb[0].mxu0
  %738 = vmatprep.mubr.bf16.mxu0 %v351
  %739 = vmatmul.mubr.bf16.gmra.mrb[0].mxu0 %v350
  %v740 = vpop.f32.mrb[0].mxu0
  %v741 = vadd.f32 0.0, %v740
  %v742 = vpop.f32.mrb[0].mxu0
  %v743 = vpop.f32.mrb[0].mxu0
  %v744 = vadd.f32 0.0, %v743
  %v745 = vpop.f32.mrb[0].mxu0
  %746 = vmatprep.mubr.bf16.mxu0 %v353
  %747 = vmatmul.mubr.bf16.gmra.mrb[0].mxu0 %v352
  %v748 = vpop.f32.mrb[0].mxu0
  %v749 = vadd.f32 0.0, %v748
  %v750 = vpop.f32.mrb[0].mxu0
  %v751 = vpop.f32.mrb[0].mxu0
  %v752 = vadd.f32 0.0, %v751
  %v753 = vpop.f32.mrb[0].mxu0
  %754 = vmatprep.mubr.bf16.mxu0 %v355
  %755 = vmatmul.mubr.bf16.gmra.mrb[0].mxu0 %v354
  %v756 = vpop.f32.mrb[0].mxu0
  %v757 = vadd.f32 0.0, %v756
  %v758 = vpop.f32.mrb[0].mxu0
  %v759 = vpop.f32.mrb[0].mxu0
  %v760 = vadd.f32 0.0, %v759
  %v761 = vpop.f32.mrb[0].mxu0
  %762 = vmatprep.mubr.bf16.mxu0 %v357
  %763 = vmatmul.mubr.bf16.gmra.mrb[0].mxu0 %v356
  %v764 = vpop.f32.mrb[0].mxu0
  %v765 = vadd.f32 0.0, %v764
  %v766 = vpop.f32.mrb[0].mxu0
  %v767 = vpop.f32.mrb[0].mxu0
  %v768 = vadd.f32 0.0, %v767
  %v769 = vpop.f32.mrb[0].mxu0
  %770 = vmatprep.mubr.bf16.mxu0 %v359
  %771 = vmatmul.mubr.bf16.gmra.mrb[0].mxu0 %v358
  %v772 = vpop.f32.mrb[0].mxu0
  %v773 = vadd.f32 0.0, %v772
  %v774 = vpop.f32.mrb[0].mxu0
  %v775 = vpop.f32.mrb[0].mxu0
  %v776 = vadd.f32 0.0, %v775
  %v777 = vpop.f32.mrb[0].mxu0
  %778 = vmatprep.mubr.bf16.mxu0 %v361
  %779 = vmatmul.mubr.bf16.gmra.mrb[0].mxu0 %v360
  %v780 = vpop.f32.mrb[0].mxu0
  %v781 = vadd.f32 0.0, %v780
  %v782 = vpop.f32.mrb[0].mxu0
  %v783 = vpop.f32.mrb[0].mxu0
  %v784 = vadd.f32 0.0, %v783
  %v785 = vpop.f32.mrb[0].mxu0
  %786 = vmatprep.mubr.bf16.mxu0 %v363
  %787 = vmatmul.mubr.bf16.gmra.mrb[0].mxu0 %v362
  %v788 = vpop.f32.mrb[0].mxu0
  %v789 = vadd.f32 0.0, %v788
  %v790 = vpop.f32.mrb[0].mxu0
  %v791 = vpop.f32.mrb[0].mxu0
  %v792 = vadd.f32 0.0, %v791
  %v793 = vpop.f32.mrb[0].mxu0
  %794 = vmatprep.mubr.bf16.mxu0 %v365
  %795 = vmatmul.mubr.bf16.gmra.mrb[0].mxu0 %v364
  %v796 = vpop.f32.mrb[0].mxu0
  %v797 = vadd.f32 0.0, %v796
  %v798 = vpop.f32.mrb[0].mxu0
  %v799 = vpop.f32.mrb[0].mxu0
  %v800 = vadd.f32 0.0, %v799
  %v801 = vpop.f32.mrb[0].mxu0
  %802 = vmatprep.mubr.bf16.mxu0 %v367
  %803 = vmatmul.mubr.bf16.gmra.mrb[0].mxu0 %v366
  %v804 = vpop.f32.mrb[0].mxu0
  %v805 = vadd.f32 0.0, %v804
  %v806 = vpop.f32.mrb[0].mxu0
  %v807 = vpop.f32.mrb[0].mxu0
  %v808 = vadd.f32 0.0, %v807
  %v809 = vpop.f32.mrb[0].mxu0
  %810 = vmatprep.mubr.bf16.mxu0 %v369
  %811 = vmatmul.mubr.bf16.gmra.mrb[0].mxu0 %v368
  %v812 = vpop.f32.mrb[0].mxu0
  %v813 = vadd.f32 0.0, %v812
  %v814 = vpop.f32.mrb[0].mxu0
  %v815 = vpop.f32.mrb[0].mxu0
  %v816 = vadd.f32 0.0, %v815
  %v817 = vpop.f32.mrb[0].mxu0
  %818 = vdwg.mxu0
  %v819 = vld [vmem:[%s2] sm:$0x1]
  %v821 = vlaneseq
  %v822 = vshrl.u32 %v821, 7
  %v823 = vsub.s32 0, %v822
  %v824 = vrot.slane %v819, %v823
  %v826 = vmul.f32 %v565, %v824
  %v827 = vmul.f32 %v568, %v824
  %v828 = vmul.f32 %v573, %v824
  %v829 = vmul.f32 %v576, %v824
  %v830 = vmul.f32 %v581, %v824
  %v831 = vmul.f32 %v584, %v824
  %v832 = vmul.f32 %v589, %v824
  %v833 = vmul.f32 %v592, %v824
  %v834 = vmul.f32 %v597, %v824
  %v835 = vmul.f32 %v600, %v824
  %v836 = vmul.f32 %v605, %v824
  %v837 = vmul.f32 %v608, %v824
  %v838 = vmul.f32 %v613, %v824
  %v839 = vmul.f32 %v616, %v824
  %v840 = vmul.f32 %v621, %v824
  %v841 = vmul.f32 %v624, %v824
  %v842 = vmul.f32 %v629, %v824
  %v843 = vmul.f32 %v632, %v824
  %v844 = vmul.f32 %v637, %v824
  %v845 = vmul.f32 %v640, %v824
  %v846 = vmul.f32 %v645, %v824
  %v847 = vmul.f32 %v648, %v824
  %v848 = vmul.f32 %v653, %v824
  %v849 = vmul.f32 %v656, %v824
  %v850 = vmul.f32 %v661, %v824
  %v851 = vmul.f32 %v664, %v824
  %v852 = vmul.f32 %v669, %v824
  %v853 = vmul.f32 %v672, %v824
  %v854 = vmul.f32 %v677, %v824
  %v855 = vmul.f32 %v680, %v824
  %v856 = vmul.f32 %v685, %v824
  %v857 = vmul.f32 %v688, %v824
  %v858 = vmul.f32 %v693, %v824
  %v859 = vmul.f32 %v696, %v824
  %v860 = vmul.f32 %v701, %v824
  %v861 = vmul.f32 %v704, %v824
  %v862 = vmul.f32 %v709, %v824
  %v863 = vmul.f32 %v712, %v824
  %v864 = vmul.f32 %v717, %v824
  %v865 = vmul.f32 %v720, %v824
  %v866 = vmul.f32 %v725, %v824
  %v867 = vmul.f32 %v728, %v824
  %v868 = vmul.f32 %v733, %v824
  %v869 = vmul.f32 %v736, %v824
  %v870 = vmul.f32 %v741, %v824
  %v871 = vmul.f32 %v744, %v824
  %v872 = vmul.f32 %v749, %v824
  %v873 = vmul.f32 %v752, %v824
  %v874 = vmul.f32 %v757, %v824
  %v875 = vmul.f32 %v760, %v824
  %v876 = vmul.f32 %v765, %v824
  %v877 = vmul.f32 %v768, %v824
  %v878 = vmul.f32 %v773, %v824
  %v879 = vmul.f32 %v776, %v824
  %v880 = vmul.f32 %v781, %v824
  %v881 = vmul.f32 %v784, %v824
  %v882 = vmul.f32 %v789, %v824
  %v883 = vmul.f32 %v792, %v824
  %v884 = vmul.f32 %v797, %v824
  %v885 = vmul.f32 %v800, %v824
  %v886 = vmul.f32 %v805, %v824
  %v887 = vmul.f32 %v808, %v824
  %v888 = vmul.f32 %v813, %v824
  %v889 = vmul.f32 %v816, %v824
  %v890 = vld [vmem:[%s3] sm:$0x1]
  %v892 = vlaneseq
  %v893 = vshrl.u32 %v892, 7
  %v894 = vsub.s32 0, %v893
  %v895 = vrot.slane %v890, %v894
  %v897 = vadd.f32 %v826, %v895
  %v898 = vadd.f32 %v827, %v895
  %v899 = vadd.f32 %v828, %v895
  %v900 = vadd.f32 %v829, %v895
  %v901 = vadd.f32 %v830, %v895
  %v902 = vadd.f32 %v831, %v895
  %v903 = vadd.f32 %v832, %v895
  %v904 = vadd.f32 %v833, %v895
  %v905 = vadd.f32 %v834, %v895
  %v906 = vadd.f32 %v835, %v895
  %v907 = vadd.f32 %v836, %v895
  %v908 = vadd.f32 %v837, %v895
  %v909 = vadd.f32 %v838, %v895
  %v910 = vadd.f32 %v839, %v895
  %v911 = vadd.f32 %v840, %v895
  %v912 = vadd.f32 %v841, %v895
  %v913 = vadd.f32 %v842, %v895
  %v914 = vadd.f32 %v843, %v895
  %v915 = vadd.f32 %v844, %v895
  %v916 = vadd.f32 %v845, %v895
  %v917 = vadd.f32 %v846, %v895
  %v918 = vadd.f32 %v847, %v895
  %v919 = vadd.f32 %v848, %v895
  %v920 = vadd.f32 %v849, %v895
  %v921 = vadd.f32 %v850, %v895
  %v922 = vadd.f32 %v851, %v895
  %v923 = vadd.f32 %v852, %v895
  %v924 = vadd.f32 %v853, %v895
  %v925 = vadd.f32 %v854, %v895
  %v926 = vadd.f32 %v855, %v895
  %v927 = vadd.f32 %v856, %v895
  %v928 = vadd.f32 %v857, %v895
  %v929 = vadd.f32 %v858, %v895
  %v930 = vadd.f32 %v859, %v895
  %v931 = vadd.f32 %v860, %v895
  %v932 = vadd.f32 %v861, %v895
  %v933 = vadd.f32 %v862, %v895
  %v934 = vadd.f32 %v863, %v895
  %v935 = vadd.f32 %v864, %v895
  %v936 = vadd.f32 %v865, %v895
  %v937 = vadd.f32 %v866, %v895
  %v938 = vadd.f32 %v867, %v895
  %v939 = vadd.f32 %v868, %v895
  %v940 = vadd.f32 %v869, %v895
  %v941 = vadd.f32 %v870, %v895
  %v942 = vadd.f32 %v871, %v895
  %v943 = vadd.f32 %v872, %v895
  %v944 = vadd.f32 %v873, %v895
  %v945 = vadd.f32 %v874, %v895
  %v946 = vadd.f32 %v875, %v895
  %v947 = vadd.f32 %v876, %v895
  %v948 = vadd.f32 %v877, %v895
  %v949 = vadd.f32 %v878, %v895
  %v950 = vadd.f32 %v879, %v895
  %v951 = vadd.f32 %v880, %v895
  %v952 = vadd.f32 %v881, %v895
  %v953 = vadd.f32 %v882, %v895
  %v954 = vadd.f32 %v883, %v895
  %v955 = vadd.f32 %v884, %v895
  %v956 = vadd.f32 %v885, %v895
  %v957 = vadd.f32 %v886, %v895
  %v958 = vadd.f32 %v887, %v895
  %v959 = vadd.f32 %v888, %v895
  %v960 = vadd.f32 %v889, %v895
  %v961 = vmax.f32 %v897, 0.0
  %v962 = vmax.f32 %v898, 0.0
  %v963 = vmax.f32 %v899, 0.0
  %v964 = vmax.f32 %v900, 0.0
  %v965 = vmax.f32 %v901, 0.0
  %v966 = vmax.f32 %v902, 0.0
  %v967 = vmax.f32 %v903, 0.0
  %v968 = vmax.f32 %v904, 0.0
  %v969 = vmax.f32 %v905, 0.0
  %v970 = vmax.f32 %v906, 0.0
  %v971 = vmax.f32 %v907, 0.0
  %v972 = vmax.f32 %v908, 0.0
  %v973 = vmax.f32 %v909, 0.0
  %v974 = vmax.f32 %v910, 0.0
  %v975 = vmax.f32 %v911, 0.0
  %v976 = vmax.f32 %v912, 0.0
  %v977 = vmax.f32 %v913, 0.0
  %v978 = vmax.f32 %v914, 0.0
  %v979 = vmax.f32 %v915, 0.0
  %v980 = vmax.f32 %v916, 0.0
  %v981 = vmax.f32 %v917, 0.0
  %v982 = vmax.f32 %v918, 0.0
  %v983 = vmax.f32 %v919, 0.0
  %v984 = vmax.f32 %v920, 0.0
  %v985 = vmax.f32 %v921, 0.0
  %v986 = vmax.f32 %v922, 0.0
  %v987 = vmax.f32 %v923, 0.0
  %v988 = vmax.f32 %v924, 0.0
  %v989 = vmax.f32 %v925, 0.0
  %v990 = vmax.f32 %v926, 0.0
  %v991 = vmax.f32 %v927, 0.0
  %v992 = vmax.f32 %v928, 0.0
  %v993 = vmax.f32 %v929, 0.0
  %v994 = vmax.f32 %v930, 0.0
  %v995 = vmax.f32 %v931, 0.0
  %v996 = vmax.f32 %v932, 0.0
  %v997 = vmax.f32 %v933, 0.0
  %v998 = vmax.f32 %v934, 0.0
  %v999 = vmax.f32 %v935, 0.0
  %v1000 = vmax.f32 %v936, 0.0
  %v1001 = vmax.f32 %v937, 0.0
  %v1002 = vmax.f32 %v938, 0.0
  %v1003 = vmax.f32 %v939, 0.0
  %v1004 = vmax.f32 %v940, 0.0
  %v1005 = vmax.f32 %v941, 0.0
  %v1006 = vmax.f32 %v942, 0.0
  %v1007 = vmax.f32 %v943, 0.0
  %v1008 = vmax.f32 %v944, 0.0
  %v1009 = vmax.f32 %v945, 0.0
  %v1010 = vmax.f32 %v946, 0.0
  %v1011 = vmax.f32 %v947, 0.0
  %v1012 = vmax.f32 %v948, 0.0
  %v1013 = vmax.f32 %v949, 0.0
  %v1014 = vmax.f32 %v950, 0.0
  %v1015 = vmax.f32 %v951, 0.0
  %v1016 = vmax.f32 %v952, 0.0
  %v1017 = vmax.f32 %v953, 0.0
  %v1018 = vmax.f32 %v954, 0.0
  %v1019 = vmax.f32 %v955, 0.0
  %v1020 = vmax.f32 %v956, 0.0
  %v1021 = vmax.f32 %v957, 0.0
  %v1022 = vmax.f32 %v958, 0.0
  %v1023 = vmax.f32 %v959, 0.0
  %v1024 = vmax.f32 %v960, 0.0
  %1025 = vst [vmem:[%s4] sm:$0xff] %v961
  %1026 = vst [vmem:[%s4 + $0x8] sm:$0xff] %v962
  %1027 = vst [vmem:[%s4 + $0x10] sm:$0xff] %v963
  %1028 = vst [vmem:[%s4 + $0x18] sm:$0xff] %v964
  %1029 = vst [vmem:[%s4 + $0x20] sm:$0xff] %v965
  %1030 = vst [vmem:[%s4 + $0x28] sm:$0xff] %v966
  %1031 = vst [vmem:[%s4 + $0x30] sm:$0xff] %v967
  %1032 = vst [vmem:[%s4 + $0x38] sm:$0xff] %v968
  %1033 = vst [vmem:[%s4 + $0x40] sm:$0xff] %v969
  %1034 = vst [vmem:[%s4 + $0x48] sm:$0xff] %v970
  %1035 = vst [vmem:[%s4 + $0x50] sm:$0xff] %v971
  %1036 = vst [vmem:[%s4 + $0x58] sm:$0xff] %v972
  %1037 = vst [vmem:[%s4 + $0x60] sm:$0xff] %v973
  %1038 = vst [vmem:[%s4 + $0x68] sm:$0xff] %v974
  %1039 = vst [vmem:[%s4 + $0x70] sm:$0xff] %v975
  %1040 = vst [vmem:[%s4 + $0x78] sm:$0xff] %v976
  %1041 = vst [vmem:[%s4 + $0x80] sm:$0xff] %v977
  %1042 = vst [vmem:[%s4 + $0x88] sm:$0xff] %v978
  %1043 = vst [vmem:[%s4 + $0x90] sm:$0xff] %v979
  %1044 = vst [vmem:[%s4 + $0x98] sm:$0xff] %v980
  %1045 = vst [vmem:[%s4 + $0xa0] sm:$0xff] %v981
  %1046 = vst [vmem:[%s4 + $0xa8] sm:$0xff] %v982
  %1047 = vst [vmem:[%s4 + $0xb0] sm:$0xff] %v983
  %1048 = vst [vmem:[%s4 + $0xb8] sm:$0xff] %v984
  %1049 = vst [vmem:[%s4 + $0xc0] sm:$0xff] %v985
  %1050 = vst [vmem:[%s4 + $0xc8] sm:$0xff] %v986
  %1051 = vst [vmem:[%s4 + $0xd0] sm:$0xff] %v987
  %1052 = vst [vmem:[%s4 + $0xd8] sm:$0xff] %v988
  %1053 = vst [vmem:[%s4 + $0xe0] sm:$0xff] %v989
  %1054 = vst [vmem:[%s4 + $0xe8] sm:$0xff] %v990
  %1055 = vst [vmem:[%s4 + $0xf0] sm:$0xff] %v991
  %1056 = vst [vmem:[%s4 + $0xf8] sm:$0xff] %v992
  %1057 = vst [vmem:[%s4 + $0x100] sm:$0xff] %v993
  %1058 = vst [vmem:[%s4 + $0x108] sm:$0xff] %v994
  %1059 = vst [vmem:[%s4 + $0x110] sm:$0xff] %v995
  %1060 = vst [vmem:[%s4 + $0x118] sm:$0xff] %v996
  %1061 = vst [vmem:[%s4 + $0x120] sm:$0xff] %v997
  %1062 = vst [vmem:[%s4 + $0x128] sm:$0xff] %v998
  %1063 = vst [vmem:[%s4 + $0x130] sm:$0xff] %v999
  %1064 = vst [vmem:[%s4 + $0x138] sm:$0xff] %v1000
  %1065 = vst [vmem:[%s4 + $0x140] sm:$0xff] %v1001
  %1066 = vst [vmem:[%s4 + $0x148] sm:$0xff] %v1002
  %1067 = vst [vmem:[%s4 + $0x150] sm:$0xff] %v1003
  %1068 = vst [vmem:[%s4 + $0x158] sm:$0xff] %v1004
  %1069 = vst [vmem:[%s4 + $0x160] sm:$0xff] %v1005
  %1070 = vst [vmem:[%s4 + $0x168] sm:$0xff] %v1006
  %1071 = vst [vmem:[%s4 + $0x170] sm:$0xff] %v1007
  %1072 = vst [vmem:[%s4 + $0x178] sm:$0xff] %v1008
  %1073 = vst [vmem:[%s4 + $0x180] sm:$0xff] %v1009
  %1074 = vst [vmem:[%s4 + $0x188] sm:$0xff] %v1010
  %1075 = vst [vmem:[%s4 + $0x190] sm:$0xff] %v1011
  %1076 = vst [vmem:[%s4 + $0x198] sm:$0xff] %v1012
  %1077 = vst [vmem:[%s4 + $0x1a0] sm:$0xff] %v1013
  %1078 = vst [vmem:[%s4 + $0x1a8] sm:$0xff] %v1014
  %1079 = vst [vmem:[%s4 + $0x1b0] sm:$0xff] %v1015
  %1080 = vst [vmem:[%s4 + $0x1b8] sm:$0xff] %v1016
  %1081 = vst [vmem:[%s4 + $0x1c0] sm:$0xff] %v1017
  %1082 = vst [vmem:[%s4 + $0x1c8] sm:$0xff] %v1018
  %1083 = vst [vmem:[%s4 + $0x1d0] sm:$0xff] %v1019
  %1084 = vst [vmem:[%s4 + $0x1d8] sm:$0xff] %v1020
  %1085 = vst [vmem:[%s4 + $0x1e0] sm:$0xff] %v1021
  %1086 = vst [vmem:[%s4 + $0x1e8] sm:$0xff] %v1022
  %1087 = vst [vmem:[%s4 + $0x1f0] sm:$0xff] %v1023
  %1088 = vst [vmem:[%s4 + $0x1f8] sm:$0xff] %v1024
  // Predicated region
  $region18: #{up_forward.3} parent=0 // pred_check
    _
  $region19: #{up_forward.3} parent=0 // pred_check_branch
    %1090 = sbr.rel (0) target = $region21
  $region20: #{up_forward.3} parent=0 // pred_region
    _
  $region21: #{up_forward.3} parent=0 // pred_fallthru
    _
  // Predicated region
  $region22: #{up_forward.3} parent=0 // pred_check
    _
  $region23: #{up_forward.3} parent=0 // pred_check_branch
    %1092 = sbr.rel (0) target = $region25
  $region24: #{up_forward.3} parent=0 // pred_region
    _
  $region25: #{up_forward.3} parent=0 // pred_fallthru
    _

</llo_original>
